<compile_context>
chip_gen: v7x
topology: tpu7x:2x2x1
jax: 0.10.0
libtpu: 0.0.40
codegen_flags: <defaults>
</compile_context>

<pallas_src>
import functools

import jax
import jax.numpy as jnp
from jax.experimental import pallas as pl
from jax.experimental.pallas import tpu as pltpu

# ----------------------------- model config ---------------------------------
B, N, S = 2, 4, 8          # batch, docs-per-example, tokens-per-doc
H, NUM_HEADS = 32, 4       # hidden size, attention heads
DH = H // NUM_HEADS        # head dim
FF = 2 * H                 # FFN intermediate size
VOCAB = 100
LN_EPS = 1e-12
_SQRT_2_OVER_PI = 0.7978845608028654

# weight ref order shared by the kernel signature and the wrapper
_WEIGHT_KEYS = ("E_pos", "ln_e_g", "ln_e_b",
                "Wqkv", "bqkv", "Wo", "bo", "ln1_g", "ln1_b",
                "Wf1", "bf1", "Wf2", "bf2", "ln2_g", "ln2_b",
                "Wp", "bp")


# ------------------------------- fused kernel --------------------------------
def _bert_doc_kernel(mode,
                     x_ref, mrow_ref, mcol_ref,
                     pos_ref, ln_e_g, ln_e_b,
                     wqkv, bqkv, wo, bo, ln1_g, ln1_b,
                     wf1, bf1, wf2, bf2, ln2_g, ln2_b,
                     wp, bp,
                     o_ref):
    """Single-layer BERT encoder + BertManager pooling for one document."""

    def _ln(z, g_ref, b_ref):
        mu = jnp.mean(z, axis=-1, keepdims=True)
        d = z - mu
        var = jnp.mean(d * d, axis=-1, keepdims=True)
        return d * jax.lax.rsqrt(var + LN_EPS) * g_ref[...] + b_ref[...]

    def _bf(t):
        return t.astype(jnp.bfloat16)

    # embeddings: word-emb rows are gathered outside (XLA glue);
    # positional add + embedding LayerNorm are fused here (no zeros operand).
    x = x_ref[0] + pos_ref[...]                                   # (S, H) f32
    h = _ln(x, ln_e_g, ln_e_b)

    # fused Q|K|V projection: one MXU push, 96-lane-wide output.
    qkv = (jnp.dot(_bf(h), wqkv[...], preferred_element_type=jnp.float32)
           + bqkv[...])                                           # (S, 3H)
    q = qkv[:, 0 * H:1 * H]
    k = qkv[:, 1 * H:2 * H]
    v = qkv[:, 2 * H:3 * H]

    mrow = mrow_ref[0]                                            # (1, S)
    neg = (mrow - 1.0) * 1e9                                      # additive key mask
    scale = 1.0 / (DH ** 0.5)

    # per-head attention; head split/merge handled entirely in-kernel.
    ctx_heads = []
    for hh in range(NUM_HEADS):
        sl = slice(hh * DH, (hh + 1) * DH)
        qh, kh, vh = _bf(q[:, sl]), _bf(k[:, sl]), _bf(v[:, sl])
        s = jax.lax.dot_general(qh, kh, (((1,), (1,)), ((), ())),
                                preferred_element_type=jnp.float32)  # (S, S)
        s = s * scale + neg
        s = s - jnp.max(s, axis=-1, keepdims=True)
        p = jnp.exp(s)
        p = p * pl.reciprocal(jnp.sum(p, axis=-1, keepdims=True), approx=True)
        ctx_heads.append(jnp.dot(_bf(p), vh,
                                 preferred_element_type=jnp.float32))  # (S, DH)
    ctx = jnp.concatenate(ctx_heads, axis=-1)                     # (S, H)

    att_o = (jnp.dot(_bf(ctx), wo[...], preferred_element_type=jnp.float32)
             + bo[...])
    h1 = _ln(h + att_o, ln1_g, ln1_b)

    # feed-forward with tanh-approx GELU (EUP-friendly).
    # TODO(synk): HF BERT's default GELU is the exact erf form (~1e-3 rel diff).
    y = (jnp.dot(_bf(h1), wf1[...], preferred_element_type=jnp.float32)
         + bf1[...])
    ff = 0.5 * y * (1.0 + jnp.tanh(_SQRT_2_OVER_PI * (y + 0.044715 * y * y * y)))
    ff2 = (jnp.dot(_bf(ff), wf2[...], preferred_element_type=jnp.float32)
           + bf2[...])
    h2 = _ln(h1 + ff2, ln2_g, ln2_b)                              # (S, H)

    # ----- BertManager pooling ------------------------------------------------
    if mode == "cls":
        cls_tok = h2[0:1, :]                                      # pooled = tanh(W.cls+b)
        pooled = jnp.tanh(jnp.dot(_bf(cls_tok), wp[...],
                                  preferred_element_type=jnp.float32) + bp[...])
    elif mode == "max":
        mcol = mcol_ref[0]                                        # (S, 1)
        pooled = jnp.max(h2 * mcol, axis=0, keepdims=True)        # (1, H)
    else:  # mean
        mcol = mcol_ref[0]
        num = jnp.sum(h2 * mcol, axis=0, keepdims=True)           # (1, H)
        den = jnp.sum(mcol, axis=0, keepdims=True)                # (1, 1)
        pooled = num * pl.reciprocal(den, approx=True)

    o_ref[0] = pooled


# ------------------------------ parameters -----------------------------------
def init_params(key):
    def nrm(k, shape, scale=0.02):
        return scale * jax.random.normal(k, shape, dtype=jnp.float32)

    ks = jax.random.split(key, 8)
    bf = jnp.bfloat16
    return {
        "E_word": nrm(ks[0], (VOCAB, H)),
        "E_pos": nrm(ks[1], (S, H)),
        "ln_e_g": jnp.ones((1, H), jnp.float32),
        "ln_e_b": jnp.zeros((1, H), jnp.float32),
        # fused Q|K|V weight slab (bf16 for native MXU rate, f32 accumulation)
        "Wqkv": nrm(ks[2], (H, 3 * H)).astype(bf),
        "bqkv": jnp.zeros((1, 3 * H), jnp.float32),
        "Wo": nrm(ks[3], (H, H)).astype(bf),
        "bo": jnp.zeros((1, H), jnp.float32),
        "ln1_g": jnp.ones((1, H), jnp.float32),
        "ln1_b": jnp.zeros((1, H), jnp.float32),
        "Wf1": nrm(ks[4], (H, FF)).astype(bf),
        "bf1": jnp.zeros((1, FF), jnp.float32),
        "Wf2": nrm(ks[5], (FF, H)).astype(bf),
        "bf2": jnp.zeros((1, H), jnp.float32),
        "ln2_g": jnp.ones((1, H), jnp.float32),
        "ln2_b": jnp.zeros((1, H), jnp.float32),
        "Wp": nrm(ks[6], (H, H)).astype(bf),
        "bp": jnp.zeros((1, H), jnp.float32),
    }


# ------------------------------ forward pass ----------------------------------
@functools.partial(jax.jit, static_argnums=(3,))
def bert_manager_forward(params, document, mask, mode="cls"):
    b, n, s = document.shape
    m = b * n

    # torch.flatten(..., start_dim=0, end_dim=1)
    ids = document.reshape(m, s)
    msk = mask.reshape(m, s).astype(jnp.float32)

    # word-embedding gather stays as plain-JAX glue; pos-add + LN are in-kernel.
    # TODO(synk): could move the gather in-kernel via PrefetchScalarGridSpec ids.
    x_emb = jnp.take(params["E_word"], ids, axis=0)               # (M, S, H)
    m_row = msk.reshape(m, 1, s)                                  # attention-key mask
    m_col = msk.reshape(m, s, 1)                                  # pooling mask

    weights = [params[k] for k in _WEIGHT_KEYS]

    in_specs = (
        [pl.BlockSpec((1, s, H), lambda i: (i, 0, 0)),            # per-doc embeddings
         pl.BlockSpec((1, 1, s), lambda i: (i, 0, 0)),            # per-doc key mask
         pl.BlockSpec((1, s, 1), lambda i: (i, 0, 0))]            # per-doc pool mask
        + [pl.BlockSpec(w.shape, lambda i: (0, 0)) for w in weights]  # weights resident
    )

    pooled = pl.pallas_call(
        functools.partial(_bert_doc_kernel, mode),
        out_shape=jax.ShapeDtypeStruct((m, 1, H), jnp.float32),
        grid=(m,),
        in_specs=in_specs,
        out_specs=pl.BlockSpec((1, 1, H), lambda i: (i, 0, 0)),
        compiler_params=pltpu.CompilerParams(
            dimension_semantics=("parallel",)),                   # split docs across TCs
    )(x_emb, m_row, m_col, *weights)

    # x.view(*document.shape[:2], H).permute(0, 2, 1) -> (B, H, N)
    out = pooled.reshape(b, n, H)
    return jnp.transpose(out, (0, 2, 1))


# ---------------------------------- main --------------------------------------
if __name__ == "__main__":
    key = jax.random.PRNGKey(0)
    k_par, k_doc, k_len = jax.random.split(key, 3)

    params = init_params(k_par)

    document = jax.random.randint(k_doc, (B, N, S), 0, VOCAB, dtype=jnp.int32)
    lengths = jax.random.randint(k_len, (B, N), 1, S + 1)         # at least 1 token
    mask = (jnp.arange(S)[None, None, :] < lengths[:, :, None]).astype(jnp.float32)

    for mode in ("cls", "max", "mean"):
        out = bert_manager_forward(params, document, mask, mode)
        out = jax.block_until_ready(out)
        assert out.shape == (B, H, N), (mode, out.shape)
        assert bool(jnp.all(jnp.isfinite(out))), mode

    print("KERNEL_OK")
</pallas_src>

<mosaic_0001>
module attributes {stable_mosaic.version = 11 : i64} {
  func.func @_bert_doc_kernel(%arg0: i32, %arg1: memref<1x8x32xf32, #tpu.memory_space<vmem>>, %arg2: memref<1x1x8xf32, #tpu.memory_space<vmem>>, %arg3: memref<1x8x1xf32, #tpu.memory_space<vmem>>, %arg4: memref<8x32xf32, #tpu.memory_space<vmem>>, %arg5: memref<1x32xf32, #tpu.memory_space<vmem>>, %arg6: memref<1x32xf32, #tpu.memory_space<vmem>>, %arg7: memref<32x96xbf16, #tpu.memory_space<vmem>>, %arg8: memref<1x96xf32, #tpu.memory_space<vmem>>, %arg9: memref<32x32xbf16, #tpu.memory_space<vmem>>, %arg10: memref<1x32xf32, #tpu.memory_space<vmem>>, %arg11: memref<1x32xf32, #tpu.memory_space<vmem>>, %arg12: memref<1x32xf32, #tpu.memory_space<vmem>>, %arg13: memref<32x64xbf16, #tpu.memory_space<vmem>>, %arg14: memref<1x64xf32, #tpu.memory_space<vmem>>, %arg15: memref<64x32xbf16, #tpu.memory_space<vmem>>, %arg16: memref<1x32xf32, #tpu.memory_space<vmem>>, %arg17: memref<1x32xf32, #tpu.memory_space<vmem>>, %arg18: memref<1x32xf32, #tpu.memory_space<vmem>>, %arg19: memref<32x32xbf16, #tpu.memory_space<vmem>>, %arg20: memref<1x32xf32, #tpu.memory_space<vmem>>, %arg21: memref<1x1x32xf32, #tpu.memory_space<vmem>>) attributes {dimension_semantics = [#tpu.dimension_semantics<parallel>], iteration_bounds = array<i64: 8>, scalar_prefetch = 0 : i64, scratch_operands = 0 : i64, tpu.core_type = #tpu.core_type<tc>, window_params = [{transform_indices = @transform_0, window_bounds = array<i64: 1, 8, 32>}, {transform_indices = @transform_1, window_bounds = array<i64: 1, 1, 8>}, {transform_indices = @transform_2, window_bounds = array<i64: 1, 8, 1>}, {pipeline_mode = #tpu.pipeline_mode<synchronous>, transform_indices = @transform_3, window_bounds = array<i64: 8, 32>}, {pipeline_mode = #tpu.pipeline_mode<synchronous>, transform_indices = @transform_4, window_bounds = array<i64: 1, 32>}, {pipeline_mode = #tpu.pipeline_mode<synchronous>, transform_indices = @transform_5, window_bounds = array<i64: 1, 32>}, {pipeline_mode = #tpu.pipeline_mode<synchronous>, transform_indices = @transform_6, window_bounds = array<i64: 32, 96>}, {pipeline_mode = #tpu.pipeline_mode<synchronous>, transform_indices = @transform_7, window_bounds = array<i64: 1, 96>}, {pipeline_mode = #tpu.pipeline_mode<synchronous>, transform_indices = @transform_8, window_bounds = array<i64: 32, 32>}, {pipeline_mode = #tpu.pipeline_mode<synchronous>, transform_indices = @transform_9, window_bounds = array<i64: 1, 32>}, {pipeline_mode = #tpu.pipeline_mode<synchronous>, transform_indices = @transform_10, window_bounds = array<i64: 1, 32>}, {pipeline_mode = #tpu.pipeline_mode<synchronous>, transform_indices = @transform_11, window_bounds = array<i64: 1, 32>}, {pipeline_mode = #tpu.pipeline_mode<synchronous>, transform_indices = @transform_12, window_bounds = array<i64: 32, 64>}, {pipeline_mode = #tpu.pipeline_mode<synchronous>, transform_indices = @transform_13, window_bounds = array<i64: 1, 64>}, {pipeline_mode = #tpu.pipeline_mode<synchronous>, transform_indices = @transform_14, window_bounds = array<i64: 64, 32>}, {pipeline_mode = #tpu.pipeline_mode<synchronous>, transform_indices = @transform_15, window_bounds = array<i64: 1, 32>}, {pipeline_mode = #tpu.pipeline_mode<synchronous>, transform_indices = @transform_16, window_bounds = array<i64: 1, 32>}, {pipeline_mode = #tpu.pipeline_mode<synchronous>, transform_indices = @transform_17, window_bounds = array<i64: 1, 32>}, {pipeline_mode = #tpu.pipeline_mode<synchronous>, transform_indices = @transform_18, window_bounds = array<i64: 32, 32>}, {pipeline_mode = #tpu.pipeline_mode<synchronous>, transform_indices = @transform_19, window_bounds = array<i64: 1, 32>}, {transform_indices = @transform_20, window_bounds = array<i64: 1, 1, 32>}]} {
    %c0 = arith.constant 0 : index
    %c0_0 = arith.constant 0 : index
    %c0_1 = arith.constant 0 : index
    %0 = vector.load %arg1[%c0, %c0_0, %c0_1] : memref<1x8x32xf32, #tpu.memory_space<vmem>>, vector<1x8x32xf32>
    %1 = vector.shape_cast %0 : vector<1x8x32xf32> to vector<8x32xf32>
    %c0_2 = arith.constant 0 : index
    %c0_3 = arith.constant 0 : index
    %2 = vector.load %arg4[%c0_2, %c0_3] : memref<8x32xf32, #tpu.memory_space<vmem>>, vector<8x32xf32>
    %3 = arith.addf %1, %2 : vector<8x32xf32>
    %cst = arith.constant dense<0.000000e+00> : vector<8xf32>
    %4 = vector.multi_reduction <add>, %3, %cst [1] : vector<8x32xf32> to vector<8xf32>
    %5 = vector.shape_cast %4 : vector<8xf32> to vector<8x1xf32>
    %cst_4 = arith.constant 3.200000e+01 : f32
    %6 = vector.broadcast %cst_4 : f32 to vector<8x1xf32>
    %7 = arith.divf %5, %6 : vector<8x1xf32>
    %8 = vector.broadcast %7 : vector<8x1xf32> to vector<8x32xf32>
    %9 = arith.subf %3, %8 : vector<8x32xf32>
    %10 = arith.mulf %9, %9 : vector<8x32xf32>
    %cst_5 = arith.constant dense<0.000000e+00> : vector<8xf32>
    %11 = vector.multi_reduction <add>, %10, %cst_5 [1] : vector<8x32xf32> to vector<8xf32>
    %12 = vector.shape_cast %11 : vector<8xf32> to vector<8x1xf32>
    %cst_6 = arith.constant 3.200000e+01 : f32
    %13 = vector.broadcast %cst_6 : f32 to vector<8x1xf32>
    %14 = arith.divf %12, %13 : vector<8x1xf32>
    %cst_7 = arith.constant 9.99999996E-13 : f32
    %15 = vector.broadcast %cst_7 : f32 to vector<8x1xf32>
    %16 = arith.addf %14, %15 : vector<8x1xf32>
    %17 = math.rsqrt %16 : vector<8x1xf32>
    %18 = vector.broadcast %17 : vector<8x1xf32> to vector<8x32xf32>
    %19 = arith.mulf %9, %18 : vector<8x32xf32>
    %c0_8 = arith.constant 0 : index
    %c0_9 = arith.constant 0 : index
    %20 = vector.load %arg5[%c0_8, %c0_9] : memref<1x32xf32, #tpu.memory_space<vmem>>, vector<1x32xf32>
    %21 = vector.broadcast %20 : vector<1x32xf32> to vector<8x32xf32>
    %22 = arith.mulf %19, %21 : vector<8x32xf32>
    %c0_10 = arith.constant 0 : index
    %c0_11 = arith.constant 0 : index
    %23 = vector.load %arg6[%c0_10, %c0_11] : memref<1x32xf32, #tpu.memory_space<vmem>>, vector<1x32xf32>
    %24 = vector.broadcast %23 : vector<1x32xf32> to vector<8x32xf32>
    %25 = arith.addf %22, %24 : vector<8x32xf32>
    %26 = arith.truncf %25 : vector<8x32xf32> to vector<8x32xbf16>
    %c0_12 = arith.constant 0 : index
    %c0_13 = arith.constant 0 : index
    %27 = vector.load %arg7[%c0_12, %c0_13] : memref<32x96xbf16, #tpu.memory_space<vmem>>, vector<32x96xbf16>
    %cst_14 = arith.constant dense<0.000000e+00> : vector<8x96xf32>
    %28 = tpu.matmul %26, %27, %cst_14 {dimension_numbers = #tpu.dot_dimension_numbers<[1], [0], [0], [1], [0, 0, 1, 1], [], []>} : vector<8x32xbf16>, vector<32x96xbf16>, vector<8x96xf32> -> vector<8x96xf32>
    %c0_15 = arith.constant 0 : index
    %c0_16 = arith.constant 0 : index
    %29 = vector.load %arg8[%c0_15, %c0_16] : memref<1x96xf32, #tpu.memory_space<vmem>>, vector<1x96xf32>
    %30 = vector.broadcast %29 : vector<1x96xf32> to vector<8x96xf32>
    %31 = arith.addf %28, %30 : vector<8x96xf32>
    %32 = vector.extract_strided_slice %31 {offsets = [0, 0], sizes = [8, 32], strides = [1, 1]} : vector<8x96xf32> to vector<8x32xf32>
    %33 = vector.extract_strided_slice %31 {offsets = [0, 32], sizes = [8, 32], strides = [1, 1]} : vector<8x96xf32> to vector<8x32xf32>
    %34 = vector.extract_strided_slice %31 {offsets = [0, 64], sizes = [8, 32], strides = [1, 1]} : vector<8x96xf32> to vector<8x32xf32>
    %c0_17 = arith.constant 0 : index
    %c0_18 = arith.constant 0 : index
    %c0_19 = arith.constant 0 : index
    %35 = vector.load %arg2[%c0_17, %c0_18, %c0_19] : memref<1x1x8xf32, #tpu.memory_space<vmem>>, vector<1x1x8xf32>
    %36 = vector.shape_cast %35 : vector<1x1x8xf32> to vector<1x8xf32>
    %cst_20 = arith.constant 1.000000e+00 : f32
    %37 = vector.broadcast %cst_20 : f32 to vector<1x8xf32>
    %38 = arith.subf %36, %37 : vector<1x8xf32>
    %cst_21 = arith.constant 1.000000e+09 : f32
    %39 = vector.broadcast %cst_21 : f32 to vector<1x8xf32>
    %40 = arith.mulf %38, %39 : vector<1x8xf32>
    %41 = vector.extract_strided_slice %32 {offsets = [0, 0], sizes = [8, 8], strides = [1, 1]} : vector<8x32xf32> to vector<8x8xf32>
    %42 = arith.truncf %41 : vector<8x8xf32> to vector<8x8xbf16>
    %43 = vector.extract_strided_slice %33 {offsets = [0, 0], sizes = [8, 8], strides = [1, 1]} : vector<8x32xf32> to vector<8x8xf32>
    %44 = arith.truncf %43 : vector<8x8xf32> to vector<8x8xbf16>
    %45 = vector.extract_strided_slice %34 {offsets = [0, 0], sizes = [8, 8], strides = [1, 1]} : vector<8x32xf32> to vector<8x8xf32>
    %46 = arith.truncf %45 : vector<8x8xf32> to vector<8x8xbf16>
    %cst_22 = arith.constant dense<0.000000e+00> : vector<8x8xf32>
    %47 = tpu.matmul %42, %44, %cst_22 {dimension_numbers = #tpu.dot_dimension_numbers<[1], [1], [0], [0], [0, 0, 1, 0], [], []>} : vector<8x8xbf16>, vector<8x8xbf16>, vector<8x8xf32> -> vector<8x8xf32>
    %cst_23 = arith.constant 0.353553385 : f32
    %48 = vector.broadcast %cst_23 : f32 to vector<8x8xf32>
    %49 = arith.mulf %47, %48 : vector<8x8xf32>
    %50 = vector.broadcast %40 : vector<1x8xf32> to vector<8x8xf32>
    %51 = arith.addf %49, %50 : vector<8x8xf32>
    %cst_24 = arith.constant dense<0xFF800000> : vector<8xf32>
    %52 = vector.multi_reduction <maximumf>, %51, %cst_24 [1] : vector<8x8xf32> to vector<8xf32>
    %53 = vector.shape_cast %52 : vector<8xf32> to vector<8x1xf32>
    %54 = vector.broadcast %53 : vector<8x1xf32> to vector<8x8xf32>
    %55 = arith.subf %51, %54 : vector<8x8xf32>
    %56 = math.exp %55 : vector<8x8xf32>
    %cst_25 = arith.constant dense<0.000000e+00> : vector<8xf32>
    %57 = vector.multi_reduction <add>, %56, %cst_25 [1] : vector<8x8xf32> to vector<8xf32>
    %58 = vector.shape_cast %57 : vector<8xf32> to vector<8x1xf32>
    %59 = tpu.reciprocal %58 {approx = true} : vector<8x1xf32> -> vector<8x1xf32>
    %60 = vector.broadcast %59 : vector<8x1xf32> to vector<8x8xf32>
    %61 = arith.mulf %56, %60 : vector<8x8xf32>
    %62 = arith.truncf %61 : vector<8x8xf32> to vector<8x8xbf16>
    %cst_26 = arith.constant dense<0.000000e+00> : vector<8x8xf32>
    %63 = tpu.matmul %62, %46, %cst_26 {dimension_numbers = #tpu.dot_dimension_numbers<[1], [0], [0], [1], [0, 0, 1, 1], [], []>} : vector<8x8xbf16>, vector<8x8xbf16>, vector<8x8xf32> -> vector<8x8xf32>
    %64 = vector.extract_strided_slice %32 {offsets = [0, 8], sizes = [8, 8], strides = [1, 1]} : vector<8x32xf32> to vector<8x8xf32>
    %65 = arith.truncf %64 : vector<8x8xf32> to vector<8x8xbf16>
    %66 = vector.extract_strided_slice %33 {offsets = [0, 8], sizes = [8, 8], strides = [1, 1]} : vector<8x32xf32> to vector<8x8xf32>
    %67 = arith.truncf %66 : vector<8x8xf32> to vector<8x8xbf16>
    %68 = vector.extract_strided_slice %34 {offsets = [0, 8], sizes = [8, 8], strides = [1, 1]} : vector<8x32xf32> to vector<8x8xf32>
    %69 = arith.truncf %68 : vector<8x8xf32> to vector<8x8xbf16>
    %cst_27 = arith.constant dense<0.000000e+00> : vector<8x8xf32>
    %70 = tpu.matmul %65, %67, %cst_27 {dimension_numbers = #tpu.dot_dimension_numbers<[1], [1], [0], [0], [0, 0, 1, 0], [], []>} : vector<8x8xbf16>, vector<8x8xbf16>, vector<8x8xf32> -> vector<8x8xf32>
    %cst_28 = arith.constant 0.353553385 : f32
    %71 = vector.broadcast %cst_28 : f32 to vector<8x8xf32>
    %72 = arith.mulf %70, %71 : vector<8x8xf32>
    %73 = vector.broadcast %40 : vector<1x8xf32> to vector<8x8xf32>
    %74 = arith.addf %72, %73 : vector<8x8xf32>
    %cst_29 = arith.constant dense<0xFF800000> : vector<8xf32>
    %75 = vector.multi_reduction <maximumf>, %74, %cst_29 [1] : vector<8x8xf32> to vector<8xf32>
    %76 = vector.shape_cast %75 : vector<8xf32> to vector<8x1xf32>
    %77 = vector.broadcast %76 : vector<8x1xf32> to vector<8x8xf32>
    %78 = arith.subf %74, %77 : vector<8x8xf32>
    %79 = math.exp %78 : vector<8x8xf32>
    %cst_30 = arith.constant dense<0.000000e+00> : vector<8xf32>
    %80 = vector.multi_reduction <add>, %79, %cst_30 [1] : vector<8x8xf32> to vector<8xf32>
    %81 = vector.shape_cast %80 : vector<8xf32> to vector<8x1xf32>
    %82 = tpu.reciprocal %81 {approx = true} : vector<8x1xf32> -> vector<8x1xf32>
    %83 = vector.broadcast %82 : vector<8x1xf32> to vector<8x8xf32>
    %84 = arith.mulf %79, %83 : vector<8x8xf32>
    %85 = arith.truncf %84 : vector<8x8xf32> to vector<8x8xbf16>
    %cst_31 = arith.constant dense<0.000000e+00> : vector<8x8xf32>
    %86 = tpu.matmul %85, %69, %cst_31 {dimension_numbers = #tpu.dot_dimension_numbers<[1], [0], [0], [1], [0, 0, 1, 1], [], []>} : vector<8x8xbf16>, vector<8x8xbf16>, vector<8x8xf32> -> vector<8x8xf32>
    %87 = vector.extract_strided_slice %32 {offsets = [0, 16], sizes = [8, 8], strides = [1, 1]} : vector<8x32xf32> to vector<8x8xf32>
    %88 = arith.truncf %87 : vector<8x8xf32> to vector<8x8xbf16>
    %89 = vector.extract_strided_slice %33 {offsets = [0, 16], sizes = [8, 8], strides = [1, 1]} : vector<8x32xf32> to vector<8x8xf32>
    %90 = arith.truncf %89 : vector<8x8xf32> to vector<8x8xbf16>
    %91 = vector.extract_strided_slice %34 {offsets = [0, 16], sizes = [8, 8], strides = [1, 1]} : vector<8x32xf32> to vector<8x8xf32>
    %92 = arith.truncf %91 : vector<8x8xf32> to vector<8x8xbf16>
    %cst_32 = arith.constant dense<0.000000e+00> : vector<8x8xf32>
    %93 = tpu.matmul %88, %90, %cst_32 {dimension_numbers = #tpu.dot_dimension_numbers<[1], [1], [0], [0], [0, 0, 1, 0], [], []>} : vector<8x8xbf16>, vector<8x8xbf16>, vector<8x8xf32> -> vector<8x8xf32>
    %cst_33 = arith.constant 0.353553385 : f32
    %94 = vector.broadcast %cst_33 : f32 to vector<8x8xf32>
    %95 = arith.mulf %93, %94 : vector<8x8xf32>
    %96 = vector.broadcast %40 : vector<1x8xf32> to vector<8x8xf32>
    %97 = arith.addf %95, %96 : vector<8x8xf32>
    %cst_34 = arith.constant dense<0xFF800000> : vector<8xf32>
    %98 = vector.multi_reduction <maximumf>, %97, %cst_34 [1] : vector<8x8xf32> to vector<8xf32>
    %99 = vector.shape_cast %98 : vector<8xf32> to vector<8x1xf32>
    %100 = vector.broadcast %99 : vector<8x1xf32> to vector<8x8xf32>
    %101 = arith.subf %97, %100 : vector<8x8xf32>
    %102 = math.exp %101 : vector<8x8xf32>
    %cst_35 = arith.constant dense<0.000000e+00> : vector<8xf32>
    %103 = vector.multi_reduction <add>, %102, %cst_35 [1] : vector<8x8xf32> to vector<8xf32>
    %104 = vector.shape_cast %103 : vector<8xf32> to vector<8x1xf32>
    %105 = tpu.reciprocal %104 {approx = true} : vector<8x1xf32> -> vector<8x1xf32>
    %106 = vector.broadcast %105 : vector<8x1xf32> to vector<8x8xf32>
    %107 = arith.mulf %102, %106 : vector<8x8xf32>
    %108 = arith.truncf %107 : vector<8x8xf32> to vector<8x8xbf16>
    %cst_36 = arith.constant dense<0.000000e+00> : vector<8x8xf32>
    %109 = tpu.matmul %108, %92, %cst_36 {dimension_numbers = #tpu.dot_dimension_numbers<[1], [0], [0], [1], [0, 0, 1, 1], [], []>} : vector<8x8xbf16>, vector<8x8xbf16>, vector<8x8xf32> -> vector<8x8xf32>
    %110 = vector.extract_strided_slice %32 {offsets = [0, 24], sizes = [8, 8], strides = [1, 1]} : vector<8x32xf32> to vector<8x8xf32>
    %111 = arith.truncf %110 : vector<8x8xf32> to vector<8x8xbf16>
    %112 = vector.extract_strided_slice %33 {offsets = [0, 24], sizes = [8, 8], strides = [1, 1]} : vector<8x32xf32> to vector<8x8xf32>
    %113 = arith.truncf %112 : vector<8x8xf32> to vector<8x8xbf16>
    %114 = vector.extract_strided_slice %34 {offsets = [0, 24], sizes = [8, 8], strides = [1, 1]} : vector<8x32xf32> to vector<8x8xf32>
    %115 = arith.truncf %114 : vector<8x8xf32> to vector<8x8xbf16>
    %cst_37 = arith.constant dense<0.000000e+00> : vector<8x8xf32>
    %116 = tpu.matmul %111, %113, %cst_37 {dimension_numbers = #tpu.dot_dimension_numbers<[1], [1], [0], [0], [0, 0, 1, 0], [], []>} : vector<8x8xbf16>, vector<8x8xbf16>, vector<8x8xf32> -> vector<8x8xf32>
    %cst_38 = arith.constant 0.353553385 : f32
    %117 = vector.broadcast %cst_38 : f32 to vector<8x8xf32>
    %118 = arith.mulf %116, %117 : vector<8x8xf32>
    %119 = vector.broadcast %40 : vector<1x8xf32> to vector<8x8xf32>
    %120 = arith.addf %118, %119 : vector<8x8xf32>
    %cst_39 = arith.constant dense<0xFF800000> : vector<8xf32>
    %121 = vector.multi_reduction <maximumf>, %120, %cst_39 [1] : vector<8x8xf32> to vector<8xf32>
    %122 = vector.shape_cast %121 : vector<8xf32> to vector<8x1xf32>
    %123 = vector.broadcast %122 : vector<8x1xf32> to vector<8x8xf32>
    %124 = arith.subf %120, %123 : vector<8x8xf32>
    %125 = math.exp %124 : vector<8x8xf32>
    %cst_40 = arith.constant dense<0.000000e+00> : vector<8xf32>
    %126 = vector.multi_reduction <add>, %125, %cst_40 [1] : vector<8x8xf32> to vector<8xf32>
    %127 = vector.shape_cast %126 : vector<8xf32> to vector<8x1xf32>
    %128 = tpu.reciprocal %127 {approx = true} : vector<8x1xf32> -> vector<8x1xf32>
    %129 = vector.broadcast %128 : vector<8x1xf32> to vector<8x8xf32>
    %130 = arith.mulf %125, %129 : vector<8x8xf32>
    %131 = arith.truncf %130 : vector<8x8xf32> to vector<8x8xbf16>
    %cst_41 = arith.constant dense<0.000000e+00> : vector<8x8xf32>
    %132 = tpu.matmul %131, %115, %cst_41 {dimension_numbers = #tpu.dot_dimension_numbers<[1], [0], [0], [1], [0, 0, 1, 1], [], []>} : vector<8x8xbf16>, vector<8x8xbf16>, vector<8x8xf32> -> vector<8x8xf32>
    %133 = tpu.concatenate %63, %86, %109, %132 in 1 : vector<8x8xf32>, vector<8x8xf32>, vector<8x8xf32>, vector<8x8xf32> -> vector<8x32xf32>
    %134 = arith.truncf %133 : vector<8x32xf32> to vector<8x32xbf16>
    %c0_42 = arith.constant 0 : index
    %c0_43 = arith.constant 0 : index
    %135 = vector.load %arg9[%c0_42, %c0_43] : memref<32x32xbf16, #tpu.memory_space<vmem>>, vector<32x32xbf16>
    %cst_44 = arith.constant dense<0.000000e+00> : vector<8x32xf32>
    %136 = tpu.matmul %134, %135, %cst_44 {dimension_numbers = #tpu.dot_dimension_numbers<[1], [0], [0], [1], [0, 0, 1, 1], [], []>} : vector<8x32xbf16>, vector<32x32xbf16>, vector<8x32xf32> -> vector<8x32xf32>
    %c0_45 = arith.constant 0 : index
    %c0_46 = arith.constant 0 : index
    %137 = vector.load %arg10[%c0_45, %c0_46] : memref<1x32xf32, #tpu.memory_space<vmem>>, vector<1x32xf32>
    %138 = vector.broadcast %137 : vector<1x32xf32> to vector<8x32xf32>
    %139 = arith.addf %136, %138 : vector<8x32xf32>
    %140 = arith.addf %25, %139 : vector<8x32xf32>
    %cst_47 = arith.constant dense<0.000000e+00> : vector<8xf32>
    %141 = vector.multi_reduction <add>, %140, %cst_47 [1] : vector<8x32xf32> to vector<8xf32>
    %142 = vector.shape_cast %141 : vector<8xf32> to vector<8x1xf32>
    %cst_48 = arith.constant 3.200000e+01 : f32
    %143 = vector.broadcast %cst_48 : f32 to vector<8x1xf32>
    %144 = arith.divf %142, %143 : vector<8x1xf32>
    %145 = vector.broadcast %144 : vector<8x1xf32> to vector<8x32xf32>
    %146 = arith.subf %140, %145 : vector<8x32xf32>
    %147 = arith.mulf %146, %146 : vector<8x32xf32>
    %cst_49 = arith.constant dense<0.000000e+00> : vector<8xf32>
    %148 = vector.multi_reduction <add>, %147, %cst_49 [1] : vector<8x32xf32> to vector<8xf32>
    %149 = vector.shape_cast %148 : vector<8xf32> to vector<8x1xf32>
    %cst_50 = arith.constant 3.200000e+01 : f32
    %150 = vector.broadcast %cst_50 : f32 to vector<8x1xf32>
    %151 = arith.divf %149, %150 : vector<8x1xf32>
    %cst_51 = arith.constant 9.99999996E-13 : f32
    %152 = vector.broadcast %cst_51 : f32 to vector<8x1xf32>
    %153 = arith.addf %151, %152 : vector<8x1xf32>
    %154 = math.rsqrt %153 : vector<8x1xf32>
    %155 = vector.broadcast %154 : vector<8x1xf32> to vector<8x32xf32>
    %156 = arith.mulf %146, %155 : vector<8x32xf32>
    %c0_52 = arith.constant 0 : index
    %c0_53 = arith.constant 0 : index
    %157 = vector.load %arg11[%c0_52, %c0_53] : memref<1x32xf32, #tpu.memory_space<vmem>>, vector<1x32xf32>
    %158 = vector.broadcast %157 : vector<1x32xf32> to vector<8x32xf32>
    %159 = arith.mulf %156, %158 : vector<8x32xf32>
    %c0_54 = arith.constant 0 : index
    %c0_55 = arith.constant 0 : index
    %160 = vector.load %arg12[%c0_54, %c0_55] : memref<1x32xf32, #tpu.memory_space<vmem>>, vector<1x32xf32>
    %161 = vector.broadcast %160 : vector<1x32xf32> to vector<8x32xf32>
    %162 = arith.addf %159, %161 : vector<8x32xf32>
    %163 = arith.truncf %162 : vector<8x32xf32> to vector<8x32xbf16>
    %c0_56 = arith.constant 0 : index
    %c0_57 = arith.constant 0 : index
    %164 = vector.load %arg13[%c0_56, %c0_57] : memref<32x64xbf16, #tpu.memory_space<vmem>>, vector<32x64xbf16>
    %cst_58 = arith.constant dense<0.000000e+00> : vector<8x64xf32>
    %165 = tpu.matmul %163, %164, %cst_58 {dimension_numbers = #tpu.dot_dimension_numbers<[1], [0], [0], [1], [0, 0, 1, 1], [], []>} : vector<8x32xbf16>, vector<32x64xbf16>, vector<8x64xf32> -> vector<8x64xf32>
    %c0_59 = arith.constant 0 : index
    %c0_60 = arith.constant 0 : index
    %166 = vector.load %arg14[%c0_59, %c0_60] : memref<1x64xf32, #tpu.memory_space<vmem>>, vector<1x64xf32>
    %167 = vector.broadcast %166 : vector<1x64xf32> to vector<8x64xf32>
    %168 = arith.addf %165, %167 : vector<8x64xf32>
    %cst_61 = arith.constant 5.000000e-01 : f32
    %169 = vector.broadcast %cst_61 : f32 to vector<8x64xf32>
    %170 = arith.mulf %169, %168 : vector<8x64xf32>
    %cst_62 = arith.constant 4.471500e-02 : f32
    %171 = vector.broadcast %cst_62 : f32 to vector<8x64xf32>
    %172 = arith.mulf %171, %168 : vector<8x64xf32>
    %173 = arith.mulf %172, %168 : vector<8x64xf32>
    %174 = arith.mulf %173, %168 : vector<8x64xf32>
    %175 = arith.addf %168, %174 : vector<8x64xf32>
    %cst_63 = arith.constant 0.797884583 : f32
    %176 = vector.broadcast %cst_63 : f32 to vector<8x64xf32>
    %177 = arith.mulf %176, %175 : vector<8x64xf32>
    %178 = math.tanh %177 : vector<8x64xf32>
    %cst_64 = arith.constant 1.000000e+00 : f32
    %179 = vector.broadcast %cst_64 : f32 to vector<8x64xf32>
    %180 = arith.addf %179, %178 : vector<8x64xf32>
    %181 = arith.mulf %170, %180 : vector<8x64xf32>
    %182 = arith.truncf %181 : vector<8x64xf32> to vector<8x64xbf16>
    %c0_65 = arith.constant 0 : index
    %c0_66 = arith.constant 0 : index
    %183 = vector.load %arg15[%c0_65, %c0_66] : memref<64x32xbf16, #tpu.memory_space<vmem>>, vector<64x32xbf16>
    %cst_67 = arith.constant dense<0.000000e+00> : vector<8x32xf32>
    %184 = tpu.matmul %182, %183, %cst_67 {dimension_numbers = #tpu.dot_dimension_numbers<[1], [0], [0], [1], [0, 0, 1, 1], [], []>} : vector<8x64xbf16>, vector<64x32xbf16>, vector<8x32xf32> -> vector<8x32xf32>
    %c0_68 = arith.constant 0 : index
    %c0_69 = arith.constant 0 : index
    %185 = vector.load %arg16[%c0_68, %c0_69] : memref<1x32xf32, #tpu.memory_space<vmem>>, vector<1x32xf32>
    %186 = vector.broadcast %185 : vector<1x32xf32> to vector<8x32xf32>
    %187 = arith.addf %184, %186 : vector<8x32xf32>
    %188 = arith.addf %162, %187 : vector<8x32xf32>
    %cst_70 = arith.constant dense<0.000000e+00> : vector<8xf32>
    %189 = vector.multi_reduction <add>, %188, %cst_70 [1] : vector<8x32xf32> to vector<8xf32>
    %190 = vector.shape_cast %189 : vector<8xf32> to vector<8x1xf32>
    %cst_71 = arith.constant 3.200000e+01 : f32
    %191 = vector.broadcast %cst_71 : f32 to vector<8x1xf32>
    %192 = arith.divf %190, %191 : vector<8x1xf32>
    %193 = vector.broadcast %192 : vector<8x1xf32> to vector<8x32xf32>
    %194 = arith.subf %188, %193 : vector<8x32xf32>
    %195 = arith.mulf %194, %194 : vector<8x32xf32>
    %cst_72 = arith.constant dense<0.000000e+00> : vector<8xf32>
    %196 = vector.multi_reduction <add>, %195, %cst_72 [1] : vector<8x32xf32> to vector<8xf32>
    %197 = vector.shape_cast %196 : vector<8xf32> to vector<8x1xf32>
    %cst_73 = arith.constant 3.200000e+01 : f32
    %198 = vector.broadcast %cst_73 : f32 to vector<8x1xf32>
    %199 = arith.divf %197, %198 : vector<8x1xf32>
    %cst_74 = arith.constant 9.99999996E-13 : f32
    %200 = vector.broadcast %cst_74 : f32 to vector<8x1xf32>
    %201 = arith.addf %199, %200 : vector<8x1xf32>
    %202 = math.rsqrt %201 : vector<8x1xf32>
    %203 = vector.broadcast %202 : vector<8x1xf32> to vector<8x32xf32>
    %204 = arith.mulf %194, %203 : vector<8x32xf32>
    %c0_75 = arith.constant 0 : index
    %c0_76 = arith.constant 0 : index
    %205 = vector.load %arg17[%c0_75, %c0_76] : memref<1x32xf32, #tpu.memory_space<vmem>>, vector<1x32xf32>
    %206 = vector.broadcast %205 : vector<1x32xf32> to vector<8x32xf32>
    %207 = arith.mulf %204, %206 : vector<8x32xf32>
    %c0_77 = arith.constant 0 : index
    %c0_78 = arith.constant 0 : index
    %208 = vector.load %arg18[%c0_77, %c0_78] : memref<1x32xf32, #tpu.memory_space<vmem>>, vector<1x32xf32>
    %209 = vector.broadcast %208 : vector<1x32xf32> to vector<8x32xf32>
    %210 = arith.addf %207, %209 : vector<8x32xf32>
    %211 = vector.extract_strided_slice %210 {offsets = [0, 0], sizes = [1, 32], strides = [1, 1]} : vector<8x32xf32> to vector<1x32xf32>
    %212 = arith.truncf %211 : vector<1x32xf32> to vector<1x32xbf16>
    %c0_79 = arith.constant 0 : index
    %c0_80 = arith.constant 0 : index
    %213 = vector.load %arg19[%c0_79, %c0_80] : memref<32x32xbf16, #tpu.memory_space<vmem>>, vector<32x32xbf16>
    %cst_81 = arith.constant dense<0.000000e+00> : vector<1x32xf32>
    %214 = tpu.matmul %212, %213, %cst_81 {dimension_numbers = #tpu.dot_dimension_numbers<[1], [0], [0], [1], [0, 0, 1, 1], [], []>} : vector<1x32xbf16>, vector<32x32xbf16>, vector<1x32xf32> -> vector<1x32xf32>
    %c0_82 = arith.constant 0 : index
    %c0_83 = arith.constant 0 : index
    %215 = vector.load %arg20[%c0_82, %c0_83] : memref<1x32xf32, #tpu.memory_space<vmem>>, vector<1x32xf32>
    %216 = arith.addf %214, %215 : vector<1x32xf32>
    %217 = math.tanh %216 : vector<1x32xf32>
    %c0_84 = arith.constant 0 : index
    %c0_85 = arith.constant 0 : index
    %c0_86 = arith.constant 0 : index
    %218 = vector.load %arg21[%c0_84, %c0_85, %c0_86] : memref<1x1x32xf32, #tpu.memory_space<vmem>>, vector<1x1x32xf32>
    %219 = vector.shape_cast %218 : vector<1x1x32xf32> to vector<1x32xf32>
    %220 = vector.shape_cast %217 : vector<1x32xf32> to vector<1x1x32xf32>
    tpu.vector_store %arg21[%c0_84, %c0_85, %c0_86], %220 {strides = array<i32>} : memref<1x1x32xf32, #tpu.memory_space<vmem>>, vector<1x1x32xf32>,
    return
  }
  func.func @transform_0(%arg0: i32) -> (i32, i32, i32) {
    %c0_i32 = arith.constant 0 : i32
    %c0_i32_0 = arith.constant 0 : i32
    %c0_i32_1 = arith.constant 0 : i32
    return %arg0, %c0_i32, %c0_i32_0 : i32, i32, i32
  }
  func.func @transform_1(%arg0: i32) -> (i32, i32, i32) {
    %c0_i32 = arith.constant 0 : i32
    %c0_i32_0 = arith.constant 0 : i32
    %c0_i32_1 = arith.constant 0 : i32
    return %arg0, %c0_i32, %c0_i32_0 : i32, i32, i32
  }
  func.func @transform_2(%arg0: i32) -> (i32, i32, i32) {
    %c0_i32 = arith.constant 0 : i32
    %c0_i32_0 = arith.constant 0 : i32
    %c0_i32_1 = arith.constant 0 : i32
    return %arg0, %c0_i32, %c0_i32_0 : i32, i32, i32
  }
  func.func @transform_3(%arg0: i32) -> (i32, i32) {
    %c0_i32 = arith.constant 0 : i32
    %c0_i32_0 = arith.constant 0 : i32
    %c0_i32_1 = arith.constant 0 : i32
    return %c0_i32, %c0_i32_0 : i32, i32
  }
  func.func @transform_4(%arg0: i32) -> (i32, i32) {
    %c0_i32 = arith.constant 0 : i32
    %c0_i32_0 = arith.constant 0 : i32
    %c0_i32_1 = arith.constant 0 : i32
    return %c0_i32, %c0_i32_0 : i32, i32
  }
  func.func @transform_5(%arg0: i32) -> (i32, i32) {
    %c0_i32 = arith.constant 0 : i32
    %c0_i32_0 = arith.constant 0 : i32
    %c0_i32_1 = arith.constant 0 : i32
    return %c0_i32, %c0_i32_0 : i32, i32
  }
  func.func @transform_6(%arg0: i32) -> (i32, i32) {
    %c0_i32 = arith.constant 0 : i32
    %c0_i32_0 = arith.constant 0 : i32
    %c0_i32_1 = arith.constant 0 : i32
    return %c0_i32, %c0_i32_0 : i32, i32
  }
  func.func @transform_7(%arg0: i32) -> (i32, i32) {
    %c0_i32 = arith.constant 0 : i32
    %c0_i32_0 = arith.constant 0 : i32
    %c0_i32_1 = arith.constant 0 : i32
    return %c0_i32, %c0_i32_0 : i32, i32
  }
  func.func @transform_8(%arg0: i32) -> (i32, i32) {
    %c0_i32 = arith.constant 0 : i32
    %c0_i32_0 = arith.constant 0 : i32
    %c0_i32_1 = arith.constant 0 : i32
    return %c0_i32, %c0_i32_0 : i32, i32
  }
  func.func @transform_9(%arg0: i32) -> (i32, i32) {
    %c0_i32 = arith.constant 0 : i32
    %c0_i32_0 = arith.constant 0 : i32
    %c0_i32_1 = arith.constant 0 : i32
    return %c0_i32, %c0_i32_0 : i32, i32
  }
  func.func @transform_10(%arg0: i32) -> (i32, i32) {
    %c0_i32 = arith.constant 0 : i32
    %c0_i32_0 = arith.constant 0 : i32
    %c0_i32_1 = arith.constant 0 : i32
    return %c0_i32, %c0_i32_0 : i32, i32
  }
  func.func @transform_11(%arg0: i32) -> (i32, i32) {
    %c0_i32 = arith.constant 0 : i32
    %c0_i32_0 = arith.constant 0 : i32
    %c0_i32_1 = arith.constant 0 : i32
    return %c0_i32, %c0_i32_0 : i32, i32
  }
  func.func @transform_12(%arg0: i32) -> (i32, i32) {
    %c0_i32 = arith.constant 0 : i32
    %c0_i32_0 = arith.constant 0 : i32
    %c0_i32_1 = arith.constant 0 : i32
    return %c0_i32, %c0_i32_0 : i32, i32
  }
  func.func @transform_13(%arg0: i32) -> (i32, i32) {
    %c0_i32 = arith.constant 0 : i32
    %c0_i32_0 = arith.constant 0 : i32
    %c0_i32_1 = arith.constant 0 : i32
    return %c0_i32, %c0_i32_0 : i32, i32
  }
  func.func @transform_14(%arg0: i32) -> (i32, i32) {
    %c0_i32 = arith.constant 0 : i32
    %c0_i32_0 = arith.constant 0 : i32
    %c0_i32_1 = arith.constant 0 : i32
    return %c0_i32, %c0_i32_0 : i32, i32
  }
  func.func @transform_15(%arg0: i32) -> (i32, i32) {
    %c0_i32 = arith.constant 0 : i32
    %c0_i32_0 = arith.constant 0 : i32
    %c0_i32_1 = arith.constant 0 : i32
    return %c0_i32, %c0_i32_0 : i32, i32
  }
  func.func @transform_16(%arg0: i32) -> (i32, i32) {
    %c0_i32 = arith.constant 0 : i32
    %c0_i32_0 = arith.constant 0 : i32
    %c0_i32_1 = arith.constant 0 : i32
    return %c0_i32, %c0_i32_0 : i32, i32
  }
  func.func @transform_17(%arg0: i32) -> (i32, i32) {
    %c0_i32 = arith.constant 0 : i32
    %c0_i32_0 = arith.constant 0 : i32
    %c0_i32_1 = arith.constant 0 : i32
    return %c0_i32, %c0_i32_0 : i32, i32
  }
  func.func @transform_18(%arg0: i32) -> (i32, i32) {
    %c0_i32 = arith.constant 0 : i32
    %c0_i32_0 = arith.constant 0 : i32
    %c0_i32_1 = arith.constant 0 : i32
    return %c0_i32, %c0_i32_0 : i32, i32
  }
  func.func @transform_19(%arg0: i32) -> (i32, i32) {
    %c0_i32 = arith.constant 0 : i32
    %c0_i32_0 = arith.constant 0 : i32
    %c0_i32_1 = arith.constant 0 : i32
    return %c0_i32, %c0_i32_0 : i32, i32
  }
  func.func @transform_20(%arg0: i32) -> (i32, i32, i32) {
    %c0_i32 = arith.constant 0 : i32
    %c0_i32_0 = arith.constant 0 : i32
    %c0_i32_1 = arith.constant 0 : i32
    return %arg0, %c0_i32, %c0_i32_0 : i32, i32, i32
  }
}

</mosaic_0001>

<llo_original>
// kernel: bert_manager_forward.1
$region0: #{bert_manager_forward.1}
  #allocation0 [shape = 'u32[]', space=smem, size = 0x4, offset = 0x4, fixed_abs, tag = 'smem constant byte address 0x4 - core index']
  #allocation1 [shape = 'u32[144,128]{1,0:T(1,128)}', space=vmem, size = 0x12000, scoped, tag = 'internal scratch']
  %s0 = inlined_call_operand.vmem [shape: f32[8,8,32], index: 0, kind: input, shape index: {}]
  %s1 = inlined_call_operand.vmem [shape: f32[8,1,8], index: 1, kind: input, shape index: {}]
  %s2 = inlined_call_operand.vmem [shape: f32[8,8,1], index: 2, kind: input, shape index: {}]
  %s3 = inlined_call_operand.vmem [shape: f32[8,32], index: 3, kind: input, shape index: {}]
  %s4 = inlined_call_operand.vmem [shape: f32[1,32], index: 4, kind: input, shape index: {}]
  %s5 = inlined_call_operand.vmem [shape: f32[1,32], index: 5, kind: input, shape index: {}]
  %s6 = inlined_call_operand.vmem [shape: bf16[32,96], index: 6, kind: input, shape index: {}]
  %s7 = inlined_call_operand.vmem [shape: f32[1,96], index: 7, kind: input, shape index: {}]
  %s8 = inlined_call_operand.vmem [shape: bf16[32,32], index: 8, kind: input, shape index: {}]
  %s9 = inlined_call_operand.vmem [shape: f32[1,32], index: 9, kind: input, shape index: {}]
  %s10 = inlined_call_operand.vmem [shape: f32[1,32], index: 10, kind: input, shape index: {}]
  %s11 = inlined_call_operand.vmem [shape: f32[1,32], index: 11, kind: input, shape index: {}]
  %s12 = inlined_call_operand.vmem [shape: bf16[32,64], index: 12, kind: input, shape index: {}]
  %s13 = inlined_call_operand.vmem [shape: f32[1,64], index: 13, kind: input, shape index: {}]
  %s14 = inlined_call_operand.vmem [shape: bf16[64,32], index: 14, kind: input, shape index: {}]
  %s15 = inlined_call_operand.vmem [shape: f32[1,32], index: 15, kind: input, shape index: {}]
  %s16 = inlined_call_operand.vmem [shape: f32[1,32], index: 16, kind: input, shape index: {}]
  %s17 = inlined_call_operand.vmem [shape: f32[1,32], index: 17, kind: input, shape index: {}]
  %s18 = inlined_call_operand.vmem [shape: bf16[32,32], index: 18, kind: input, shape index: {}]
  %s19 = inlined_call_operand.vmem [shape: f32[1,32], index: 19, kind: input, shape index: {}]
  %s20 = inlined_call_operand.hbm [shape: f32[8,1,32], index: 20, kind: output, shape index: {}]
  %s21 = sld [smem:[#allocation0]]
  $region113: #{bert_manager_forward.1} parent=0
    _
  %s23 = ssub.s32 1, %s21
  %s24 = scalar_select 0, %s23, %s21
  $region1: #{bert_manager_forward.1} parent=0
    #allocation2 [shape = 'u8[1024]{0}', space=vmem, size = 0x400, scoped, tag = 'output window, operand 0']
    #allocation3 [shape = 's32[2]{0}', space=sflag, size = 0x8, scoped, tag = 'scoped memory for bert_manager_forward.1']
    %25 = vsyncpa [#allocation3], 0
    %s26 = scalar_lea.sflag [#allocation3], 1
    %27 = vsyncpa %s26, 0
    loop: start=0, step=1, limit=10
    $region2: #{bert_manager_forward.1} parent=1 // loop_pre_header
      _
    $region3: #{bert_manager_forward.1} parent=1 // loop_header
      %s29 = sphi 0, %s33
      %p30 = scmp.ge.s32.totalorder %s29, 10
      %s39 = sphi 0, %s41
      %s42 = sphi 0, %s39
      %s43 = sphi 0, %s42
      %s59 = sphi 0, %s43
      %s65 = sphi 0, %s67
      %s68 = sphi 0, %s65
      %s69 = sphi 0, %s68
      %s85 = sphi 0, %s69
      %s91 = sphi 0, %s93
      %s94 = sphi 0, %s91
      %s95 = sphi 0, %s94
      %s111 = sphi 0, %s95
      %s115 = sphi 0, %s115
      %s117 = sphi 0, %s115
      %s118 = sphi 0, %s117
      %s132 = sphi 0, %s118
      %s136 = sphi 0, %s136
      %s138 = sphi 0, %s136
      %s139 = sphi 0, %s138
      %s153 = sphi 0, %s139
      %s157 = sphi 0, %s157
      %s159 = sphi 0, %s157
      %s160 = sphi 0, %s159
      %s174 = sphi 0, %s160
      %s178 = sphi 0, %s178
      %s180 = sphi 0, %s178
      %s181 = sphi 0, %s180
      %s195 = sphi 0, %s181
      %s199 = sphi 0, %s199
      %s201 = sphi 0, %s199
      %s202 = sphi 0, %s201
      %s216 = sphi 0, %s202
      %s220 = sphi 0, %s220
      %s222 = sphi 0, %s220
      %s223 = sphi 0, %s222
      %s237 = sphi 0, %s223
      %s241 = sphi 0, %s241
      %s243 = sphi 0, %s241
      %s244 = sphi 0, %s243
      %s258 = sphi 0, %s244
      %s262 = sphi 0, %s262
      %s264 = sphi 0, %s262
      %s265 = sphi 0, %s264
      %s279 = sphi 0, %s265
      %s283 = sphi 0, %s283
      %s285 = sphi 0, %s283
      %s286 = sphi 0, %s285
      %s300 = sphi 0, %s286
      %s304 = sphi 0, %s304
      %s306 = sphi 0, %s304
      %s307 = sphi 0, %s306
      %s321 = sphi 0, %s307
      %s325 = sphi 0, %s325
      %s327 = sphi 0, %s325
      %s328 = sphi 0, %s327
      %s342 = sphi 0, %s328
      %s346 = sphi 0, %s346
      %s348 = sphi 0, %s346
      %s349 = sphi 0, %s348
      %s363 = sphi 0, %s349
      %s367 = sphi 0, %s367
      %s369 = sphi 0, %s367
      %s370 = sphi 0, %s369
      %s384 = sphi 0, %s370
      %s388 = sphi 0, %s388
      %s390 = sphi 0, %s388
      %s391 = sphi 0, %s390
      %s405 = sphi 0, %s391
      %s409 = sphi 0, %s409
      %s411 = sphi 0, %s409
      %s412 = sphi 0, %s411
      %s426 = sphi 0, %s412
      %s430 = sphi 0, %s430
      %s432 = sphi 0, %s430
      %s433 = sphi 0, %s432
      %s447 = sphi 0, %s433
      %s451 = sphi 0, %s451
      %s453 = sphi 0, %s451
      %s454 = sphi 0, %s453
      %s468 = sphi 0, %s454
      %s474 = sphi 0, %s476
      %s477 = sphi 0, %s474
      %s478 = sphi 0, %s477
      %s494 = sphi 0, %s478
    $region4: #{bert_manager_forward.1} parent=1 // loop_header_branch
      %32 = sbr.rel (%p30) target = $region8
    $region5: #{bert_manager_forward.1} parent=1 // loop_body
      %s34 = ssub.s32 %s29, 1
      %s35 = ssub.s32 %s29, 2
      %s36 = sadd.s32 %s29, 1
      %s37 = ssub.s32 %s29, %s36
      %p38 = scmp.eq.s32.totalorder %s37, 0
      %s40 = sadd.s32 %s39, 1
      %s41 = scalar_select %p38, %s39, %s40
      %p44 = pneg %p38
      %p45 = scmp.eq.s32.totalorder %s29, 7
      %p46 = por %p44, %p45
      %p47 = scmp.ne.s32.totalorder %s39, %s42
      %p48 = scmp.eq.s32.totalorder %s29, 0
      %p49 = por %p47, %p48
      %p50 = scmp.ne.s32.totalorder %s39, %s42
      %p51 = scmp.eq.s32.totalorder %s34, 7
      %p52 = por %p50, %p51
      %p53 = scmp.ne.s32.totalorder %s42, %s43
      %p54 = scmp.eq.s32.totalorder %s34, 0
      %p55 = por %p53, %p54
      %p56 = scmp.ne.s32.totalorder %s42, %s43
      %p57 = scmp.eq.s32.totalorder %s35, 7
      %p58 = por %p56, %p57
      %p60 = scmp.ne.s32.totalorder %s43, %s59
      %p61 = scmp.eq.s32.totalorder %s35, 0
      %p62 = por %p60, %p61
      %s63 = ssub.s32 %s29, %s36
      %p64 = scmp.eq.s32.totalorder %s63, 0
      %s66 = sadd.s32 %s65, 1
      %s67 = scalar_select %p64, %s65, %s66
      %p70 = pneg %p64
      %p71 = scmp.eq.s32.totalorder %s29, 7
      %p72 = por %p70, %p71
      %p73 = scmp.ne.s32.totalorder %s65, %s68
      %p74 = scmp.eq.s32.totalorder %s29, 0
      %p75 = por %p73, %p74
      %p76 = scmp.ne.s32.totalorder %s65, %s68
      %p77 = scmp.eq.s32.totalorder %s34, 7
      %p78 = por %p76, %p77
      %p79 = scmp.ne.s32.totalorder %s68, %s69
      %p80 = scmp.eq.s32.totalorder %s34, 0
      %p81 = por %p79, %p80
      %p82 = scmp.ne.s32.totalorder %s68, %s69
      %p83 = scmp.eq.s32.totalorder %s35, 7
      %p84 = por %p82, %p83
      %p86 = scmp.ne.s32.totalorder %s69, %s85
      %p87 = scmp.eq.s32.totalorder %s35, 0
      %p88 = por %p86, %p87
      %s89 = ssub.s32 %s29, %s36
      %p90 = scmp.eq.s32.totalorder %s89, 0
      %s92 = sadd.s32 %s91, 1
      %s93 = scalar_select %p90, %s91, %s92
      %p96 = pneg %p90
      %p97 = scmp.eq.s32.totalorder %s29, 7
      %p98 = por %p96, %p97
      %p99 = scmp.ne.s32.totalorder %s91, %s94
      %p100 = scmp.eq.s32.totalorder %s29, 0
      %p101 = por %p99, %p100
      %p102 = scmp.ne.s32.totalorder %s91, %s94
      %p103 = scmp.eq.s32.totalorder %s34, 7
      %p104 = por %p102, %p103
      %p105 = scmp.ne.s32.totalorder %s94, %s95
      %p106 = scmp.eq.s32.totalorder %s34, 0
      %p107 = por %p105, %p106
      %p108 = scmp.ne.s32.totalorder %s94, %s95
      %p109 = scmp.eq.s32.totalorder %s35, 7
      %p110 = por %p108, %p109
      %p112 = scmp.ne.s32.totalorder %s95, %s111
      %p113 = scmp.eq.s32.totalorder %s35, 0
      %p114 = por %p112, %p113
      %s116 = sadd.s32 %s115, 1
      %p119 = scmp.eq.s32.totalorder %s29, 7
      %p120 = scmp.ne.s32.totalorder %s115, %s117
      %p121 = scmp.eq.s32.totalorder %s29, 0
      %p122 = por %p120, %p121
      %p123 = scmp.ne.s32.totalorder %s115, %s117
      %p124 = scmp.eq.s32.totalorder %s34, 7
      %p125 = por %p123, %p124
      %p126 = scmp.ne.s32.totalorder %s117, %s118
      %p127 = scmp.eq.s32.totalorder %s34, 0
      %p128 = por %p126, %p127
      %p129 = scmp.ne.s32.totalorder %s117, %s118
      %p130 = scmp.eq.s32.totalorder %s35, 7
      %p131 = por %p129, %p130
      %p133 = scmp.ne.s32.totalorder %s118, %s132
      %p134 = scmp.eq.s32.totalorder %s35, 0
      %p135 = por %p133, %p134
      %s137 = sadd.s32 %s136, 1
      %p140 = scmp.eq.s32.totalorder %s29, 7
      %p141 = scmp.ne.s32.totalorder %s136, %s138
      %p142 = scmp.eq.s32.totalorder %s29, 0
      %p143 = por %p141, %p142
      %p144 = scmp.ne.s32.totalorder %s136, %s138
      %p145 = scmp.eq.s32.totalorder %s34, 7
      %p146 = por %p144, %p145
      %p147 = scmp.ne.s32.totalorder %s138, %s139
      %p148 = scmp.eq.s32.totalorder %s34, 0
      %p149 = por %p147, %p148
      %p150 = scmp.ne.s32.totalorder %s138, %s139
      %p151 = scmp.eq.s32.totalorder %s35, 7
      %p152 = por %p150, %p151
      %p154 = scmp.ne.s32.totalorder %s139, %s153
      %p155 = scmp.eq.s32.totalorder %s35, 0
      %p156 = por %p154, %p155
      %s158 = sadd.s32 %s157, 1
      %p161 = scmp.eq.s32.totalorder %s29, 7
      %p162 = scmp.ne.s32.totalorder %s157, %s159
      %p163 = scmp.eq.s32.totalorder %s29, 0
      %p164 = por %p162, %p163
      %p165 = scmp.ne.s32.totalorder %s157, %s159
      %p166 = scmp.eq.s32.totalorder %s34, 7
      %p167 = por %p165, %p166
      %p168 = scmp.ne.s32.totalorder %s159, %s160
      %p169 = scmp.eq.s32.totalorder %s34, 0
      %p170 = por %p168, %p169
      %p171 = scmp.ne.s32.totalorder %s159, %s160
      %p172 = scmp.eq.s32.totalorder %s35, 7
      %p173 = por %p171, %p172
      %p175 = scmp.ne.s32.totalorder %s160, %s174
      %p176 = scmp.eq.s32.totalorder %s35, 0
      %p177 = por %p175, %p176
      %s179 = sadd.s32 %s178, 1
      %p182 = scmp.eq.s32.totalorder %s29, 7
      %p183 = scmp.ne.s32.totalorder %s178, %s180
      %p184 = scmp.eq.s32.totalorder %s29, 0
      %p185 = por %p183, %p184
      %p186 = scmp.ne.s32.totalorder %s178, %s180
      %p187 = scmp.eq.s32.totalorder %s34, 7
      %p188 = por %p186, %p187
      %p189 = scmp.ne.s32.totalorder %s180, %s181
      %p190 = scmp.eq.s32.totalorder %s34, 0
      %p191 = por %p189, %p190
      %p192 = scmp.ne.s32.totalorder %s180, %s181
      %p193 = scmp.eq.s32.totalorder %s35, 7
      %p194 = por %p192, %p193
      %p196 = scmp.ne.s32.totalorder %s181, %s195
      %p197 = scmp.eq.s32.totalorder %s35, 0
      %p198 = por %p196, %p197
      %s200 = sadd.s32 %s199, 1
      %p203 = scmp.eq.s32.totalorder %s29, 7
      %p204 = scmp.ne.s32.totalorder %s199, %s201
      %p205 = scmp.eq.s32.totalorder %s29, 0
      %p206 = por %p204, %p205
      %p207 = scmp.ne.s32.totalorder %s199, %s201
      %p208 = scmp.eq.s32.totalorder %s34, 7
      %p209 = por %p207, %p208
      %p210 = scmp.ne.s32.totalorder %s201, %s202
      %p211 = scmp.eq.s32.totalorder %s34, 0
      %p212 = por %p210, %p211
      %p213 = scmp.ne.s32.totalorder %s201, %s202
      %p214 = scmp.eq.s32.totalorder %s35, 7
      %p215 = por %p213, %p214
      %p217 = scmp.ne.s32.totalorder %s202, %s216
      %p218 = scmp.eq.s32.totalorder %s35, 0
      %p219 = por %p217, %p218
      %s221 = sadd.s32 %s220, 1
      %p224 = scmp.eq.s32.totalorder %s29, 7
      %p225 = scmp.ne.s32.totalorder %s220, %s222
      %p226 = scmp.eq.s32.totalorder %s29, 0
      %p227 = por %p225, %p226
      %p228 = scmp.ne.s32.totalorder %s220, %s222
      %p229 = scmp.eq.s32.totalorder %s34, 7
      %p230 = por %p228, %p229
      %p231 = scmp.ne.s32.totalorder %s222, %s223
      %p232 = scmp.eq.s32.totalorder %s34, 0
      %p233 = por %p231, %p232
      %p234 = scmp.ne.s32.totalorder %s222, %s223
      %p235 = scmp.eq.s32.totalorder %s35, 7
      %p236 = por %p234, %p235
      %p238 = scmp.ne.s32.totalorder %s223, %s237
      %p239 = scmp.eq.s32.totalorder %s35, 0
      %p240 = por %p238, %p239
      %s242 = sadd.s32 %s241, 1
      %p245 = scmp.eq.s32.totalorder %s29, 7
      %p246 = scmp.ne.s32.totalorder %s241, %s243
      %p247 = scmp.eq.s32.totalorder %s29, 0
      %p248 = por %p246, %p247
      %p249 = scmp.ne.s32.totalorder %s241, %s243
      %p250 = scmp.eq.s32.totalorder %s34, 7
      %p251 = por %p249, %p250
      %p252 = scmp.ne.s32.totalorder %s243, %s244
      %p253 = scmp.eq.s32.totalorder %s34, 0
      %p254 = por %p252, %p253
      %p255 = scmp.ne.s32.totalorder %s243, %s244
      %p256 = scmp.eq.s32.totalorder %s35, 7
      %p257 = por %p255, %p256
      %p259 = scmp.ne.s32.totalorder %s244, %s258
      %p260 = scmp.eq.s32.totalorder %s35, 0
      %p261 = por %p259, %p260
      %s263 = sadd.s32 %s262, 1
      %p266 = scmp.eq.s32.totalorder %s29, 7
      %p267 = scmp.ne.s32.totalorder %s262, %s264
      %p268 = scmp.eq.s32.totalorder %s29, 0
      %p269 = por %p267, %p268
      %p270 = scmp.ne.s32.totalorder %s262, %s264
      %p271 = scmp.eq.s32.totalorder %s34, 7
      %p272 = por %p270, %p271
      %p273 = scmp.ne.s32.totalorder %s264, %s265
      %p274 = scmp.eq.s32.totalorder %s34, 0
      %p275 = por %p273, %p274
      %p276 = scmp.ne.s32.totalorder %s264, %s265
      %p277 = scmp.eq.s32.totalorder %s35, 7
      %p278 = por %p276, %p277
      %p280 = scmp.ne.s32.totalorder %s265, %s279
      %p281 = scmp.eq.s32.totalorder %s35, 0
      %p282 = por %p280, %p281
      %s284 = sadd.s32 %s283, 1
      %p287 = scmp.eq.s32.totalorder %s29, 7
      %p288 = scmp.ne.s32.totalorder %s283, %s285
      %p289 = scmp.eq.s32.totalorder %s29, 0
      %p290 = por %p288, %p289
      %p291 = scmp.ne.s32.totalorder %s283, %s285
      %p292 = scmp.eq.s32.totalorder %s34, 7
      %p293 = por %p291, %p292
      %p294 = scmp.ne.s32.totalorder %s285, %s286
      %p295 = scmp.eq.s32.totalorder %s34, 0
      %p296 = por %p294, %p295
      %p297 = scmp.ne.s32.totalorder %s285, %s286
      %p298 = scmp.eq.s32.totalorder %s35, 7
      %p299 = por %p297, %p298
      %p301 = scmp.ne.s32.totalorder %s286, %s300
      %p302 = scmp.eq.s32.totalorder %s35, 0
      %p303 = por %p301, %p302
      %s305 = sadd.s32 %s304, 1
      %p308 = scmp.eq.s32.totalorder %s29, 7
      %p309 = scmp.ne.s32.totalorder %s304, %s306
      %p310 = scmp.eq.s32.totalorder %s29, 0
      %p311 = por %p309, %p310
      %p312 = scmp.ne.s32.totalorder %s304, %s306
      %p313 = scmp.eq.s32.totalorder %s34, 7
      %p314 = por %p312, %p313
      %p315 = scmp.ne.s32.totalorder %s306, %s307
      %p316 = scmp.eq.s32.totalorder %s34, 0
      %p317 = por %p315, %p316
      %p318 = scmp.ne.s32.totalorder %s306, %s307
      %p319 = scmp.eq.s32.totalorder %s35, 7
      %p320 = por %p318, %p319
      %p322 = scmp.ne.s32.totalorder %s307, %s321
      %p323 = scmp.eq.s32.totalorder %s35, 0
      %p324 = por %p322, %p323
      %s326 = sadd.s32 %s325, 1
      %p329 = scmp.eq.s32.totalorder %s29, 7
      %p330 = scmp.ne.s32.totalorder %s325, %s327
      %p331 = scmp.eq.s32.totalorder %s29, 0
      %p332 = por %p330, %p331
      %p333 = scmp.ne.s32.totalorder %s325, %s327
      %p334 = scmp.eq.s32.totalorder %s34, 7
      %p335 = por %p333, %p334
      %p336 = scmp.ne.s32.totalorder %s327, %s328
      %p337 = scmp.eq.s32.totalorder %s34, 0
      %p338 = por %p336, %p337
      %p339 = scmp.ne.s32.totalorder %s327, %s328
      %p340 = scmp.eq.s32.totalorder %s35, 7
      %p341 = por %p339, %p340
      %p343 = scmp.ne.s32.totalorder %s328, %s342
      %p344 = scmp.eq.s32.totalorder %s35, 0
      %p345 = por %p343, %p344
      %s347 = sadd.s32 %s346, 1
      %p350 = scmp.eq.s32.totalorder %s29, 7
      %p351 = scmp.ne.s32.totalorder %s346, %s348
      %p352 = scmp.eq.s32.totalorder %s29, 0
      %p353 = por %p351, %p352
      %p354 = scmp.ne.s32.totalorder %s346, %s348
      %p355 = scmp.eq.s32.totalorder %s34, 7
      %p356 = por %p354, %p355
      %p357 = scmp.ne.s32.totalorder %s348, %s349
      %p358 = scmp.eq.s32.totalorder %s34, 0
      %p359 = por %p357, %p358
      %p360 = scmp.ne.s32.totalorder %s348, %s349
      %p361 = scmp.eq.s32.totalorder %s35, 7
      %p362 = por %p360, %p361
      %p364 = scmp.ne.s32.totalorder %s349, %s363
      %p365 = scmp.eq.s32.totalorder %s35, 0
      %p366 = por %p364, %p365
      %s368 = sadd.s32 %s367, 1
      %p371 = scmp.eq.s32.totalorder %s29, 7
      %p372 = scmp.ne.s32.totalorder %s367, %s369
      %p373 = scmp.eq.s32.totalorder %s29, 0
      %p374 = por %p372, %p373
      %p375 = scmp.ne.s32.totalorder %s367, %s369
      %p376 = scmp.eq.s32.totalorder %s34, 7
      %p377 = por %p375, %p376
      %p378 = scmp.ne.s32.totalorder %s369, %s370
      %p379 = scmp.eq.s32.totalorder %s34, 0
      %p380 = por %p378, %p379
      %p381 = scmp.ne.s32.totalorder %s369, %s370
      %p382 = scmp.eq.s32.totalorder %s35, 7
      %p383 = por %p381, %p382
      %p385 = scmp.ne.s32.totalorder %s370, %s384
      %p386 = scmp.eq.s32.totalorder %s35, 0
      %p387 = por %p385, %p386
      %s389 = sadd.s32 %s388, 1
      %p392 = scmp.eq.s32.totalorder %s29, 7
      %p393 = scmp.ne.s32.totalorder %s388, %s390
      %p394 = scmp.eq.s32.totalorder %s29, 0
      %p395 = por %p393, %p394
      %p396 = scmp.ne.s32.totalorder %s388, %s390
      %p397 = scmp.eq.s32.totalorder %s34, 7
      %p398 = por %p396, %p397
      %p399 = scmp.ne.s32.totalorder %s390, %s391
      %p400 = scmp.eq.s32.totalorder %s34, 0
      %p401 = por %p399, %p400
      %p402 = scmp.ne.s32.totalorder %s390, %s391
      %p403 = scmp.eq.s32.totalorder %s35, 7
      %p404 = por %p402, %p403
      %p406 = scmp.ne.s32.totalorder %s391, %s405
      %p407 = scmp.eq.s32.totalorder %s35, 0
      %p408 = por %p406, %p407
      %s410 = sadd.s32 %s409, 1
      %p413 = scmp.eq.s32.totalorder %s29, 7
      %p414 = scmp.ne.s32.totalorder %s409, %s411
      %p415 = scmp.eq.s32.totalorder %s29, 0
      %p416 = por %p414, %p415
      %p417 = scmp.ne.s32.totalorder %s409, %s411
      %p418 = scmp.eq.s32.totalorder %s34, 7
      %p419 = por %p417, %p418
      %p420 = scmp.ne.s32.totalorder %s411, %s412
      %p421 = scmp.eq.s32.totalorder %s34, 0
      %p422 = por %p420, %p421
      %p423 = scmp.ne.s32.totalorder %s411, %s412
      %p424 = scmp.eq.s32.totalorder %s35, 7
      %p425 = por %p423, %p424
      %p427 = scmp.ne.s32.totalorder %s412, %s426
      %p428 = scmp.eq.s32.totalorder %s35, 0
      %p429 = por %p427, %p428
      %s431 = sadd.s32 %s430, 1
      %p434 = scmp.eq.s32.totalorder %s29, 7
      %p435 = scmp.ne.s32.totalorder %s430, %s432
      %p436 = scmp.eq.s32.totalorder %s29, 0
      %p437 = por %p435, %p436
      %p438 = scmp.ne.s32.totalorder %s430, %s432
      %p439 = scmp.eq.s32.totalorder %s34, 7
      %p440 = por %p438, %p439
      %p441 = scmp.ne.s32.totalorder %s432, %s433
      %p442 = scmp.eq.s32.totalorder %s34, 0
      %p443 = por %p441, %p442
      %p444 = scmp.ne.s32.totalorder %s432, %s433
      %p445 = scmp.eq.s32.totalorder %s35, 7
      %p446 = por %p444, %p445
      %p448 = scmp.ne.s32.totalorder %s433, %s447
      %p449 = scmp.eq.s32.totalorder %s35, 0
      %p450 = por %p448, %p449
      %s452 = sadd.s32 %s451, 1
      %p455 = scmp.eq.s32.totalorder %s29, 7
      %p456 = scmp.ne.s32.totalorder %s451, %s453
      %p457 = scmp.eq.s32.totalorder %s29, 0
      %p458 = por %p456, %p457
      %p459 = scmp.ne.s32.totalorder %s451, %s453
      %p460 = scmp.eq.s32.totalorder %s34, 7
      %p461 = por %p459, %p460
      %p462 = scmp.ne.s32.totalorder %s453, %s454
      %p463 = scmp.eq.s32.totalorder %s34, 0
      %p464 = por %p462, %p463
      %p465 = scmp.ne.s32.totalorder %s453, %s454
      %p466 = scmp.eq.s32.totalorder %s35, 7
      %p467 = por %p465, %p466
      %p469 = scmp.ne.s32.totalorder %s454, %s468
      %p470 = scmp.eq.s32.totalorder %s35, 0
      %p471 = por %p469, %p470
      %s472 = ssub.s32 %s29, %s36
      %p473 = scmp.eq.s32.totalorder %s472, 0
      %s475 = sadd.s32 %s474, 1
      %s476 = scalar_select %p473, %s474, %s475
      %p479 = pneg %p473
      %p480 = scmp.eq.s32.totalorder %s29, 7
      %p481 = por %p479, %p480
      %p482 = scmp.ne.s32.totalorder %s474, %s477
      %p483 = scmp.eq.s32.totalorder %s29, 0
      %p484 = por %p482, %p483
      %p485 = scmp.ne.s32.totalorder %s474, %s477
      %p486 = scmp.eq.s32.totalorder %s34, 7
      %p487 = por %p485, %p486
      %p488 = scmp.ne.s32.totalorder %s477, %s478
      %p489 = scmp.eq.s32.totalorder %s34, 0
      %p490 = por %p488, %p489
      %p491 = scmp.ne.s32.totalorder %s477, %s478
      %p492 = scmp.eq.s32.totalorder %s35, 7
      %p493 = por %p491, %p492
      %p495 = scmp.ne.s32.totalorder %s478, %s494
      %p496 = scmp.eq.s32.totalorder %s35, 0
      %p497 = por %p495, %p496
      %p498 = scmp.le.s32.totalorder 1, %s29
      %p499 = scmp.lt.s32.totalorder %s29, 9
      %p500 = pnand %p498, %p499
      %p501 = pneg %p500
      // Predicated region
      $region9: #{bert_manager_forward.1} parent=5 // pred_check
        _
      $region10: #{bert_manager_forward.1} parent=5 // pred_check_branch
        %503 = sbr.rel (%p500) target = $region12
      $region11: #{bert_manager_forward.1} parent=5 // pred_region
        %s504 = ssub.s32 %s29, 1
        // Predicated region
        $region13: #{bert_manager_forward.1} parent=11 // pred_check
          %p505 = pneg %p128
        $region14: #{bert_manager_forward.1} parent=11 // pred_check_branch
          %507 = sbr.rel (%p505) target = $region16
        $region15: #{bert_manager_forward.1} parent=11 // pred_region
          _
        $region16: #{bert_manager_forward.1} parent=11 // pred_fallthru
          _
        // Predicated region
        $region17: #{bert_manager_forward.1} parent=11 // pred_check
          %p508 = pneg %p149
        $region18: #{bert_manager_forward.1} parent=11 // pred_check_branch
          %510 = sbr.rel (%p508) target = $region20
        $region19: #{bert_manager_forward.1} parent=11 // pred_region
          _
        $region20: #{bert_manager_forward.1} parent=11 // pred_fallthru
          _
        // Predicated region
        $region21: #{bert_manager_forward.1} parent=11 // pred_check
          %p511 = pneg %p170
        $region22: #{bert_manager_forward.1} parent=11 // pred_check_branch
          %513 = sbr.rel (%p511) target = $region24
        $region23: #{bert_manager_forward.1} parent=11 // pred_region
          _
        $region24: #{bert_manager_forward.1} parent=11 // pred_fallthru
          _
        // Predicated region
        $region25: #{bert_manager_forward.1} parent=11 // pred_check
          %p514 = pneg %p191
        $region26: #{bert_manager_forward.1} parent=11 // pred_check_branch
          %516 = sbr.rel (%p514) target = $region28
        $region27: #{bert_manager_forward.1} parent=11 // pred_region
          _
        $region28: #{bert_manager_forward.1} parent=11 // pred_fallthru
          _
        // Predicated region
        $region29: #{bert_manager_forward.1} parent=11 // pred_check
          %p517 = pneg %p212
        $region30: #{bert_manager_forward.1} parent=11 // pred_check_branch
          %519 = sbr.rel (%p517) target = $region32
        $region31: #{bert_manager_forward.1} parent=11 // pred_region
          _
        $region32: #{bert_manager_forward.1} parent=11 // pred_fallthru
          _
        // Predicated region
        $region33: #{bert_manager_forward.1} parent=11 // pred_check
          %p520 = pneg %p233
        $region34: #{bert_manager_forward.1} parent=11 // pred_check_branch
          %522 = sbr.rel (%p520) target = $region36
        $region35: #{bert_manager_forward.1} parent=11 // pred_region
          _
        $region36: #{bert_manager_forward.1} parent=11 // pred_fallthru
          _
        // Predicated region
        $region37: #{bert_manager_forward.1} parent=11 // pred_check
          %p523 = pneg %p254
        $region38: #{bert_manager_forward.1} parent=11 // pred_check_branch
          %525 = sbr.rel (%p523) target = $region40
        $region39: #{bert_manager_forward.1} parent=11 // pred_region
          _
        $region40: #{bert_manager_forward.1} parent=11 // pred_fallthru
          _
        // Predicated region
        $region41: #{bert_manager_forward.1} parent=11 // pred_check
          %p526 = pneg %p275
        $region42: #{bert_manager_forward.1} parent=11 // pred_check_branch
          %528 = sbr.rel (%p526) target = $region44
        $region43: #{bert_manager_forward.1} parent=11 // pred_region
          _
        $region44: #{bert_manager_forward.1} parent=11 // pred_fallthru
          _
        // Predicated region
        $region45: #{bert_manager_forward.1} parent=11 // pred_check
          %p529 = pneg %p296
        $region46: #{bert_manager_forward.1} parent=11 // pred_check_branch
          %531 = sbr.rel (%p529) target = $region48
        $region47: #{bert_manager_forward.1} parent=11 // pred_region
          _
        $region48: #{bert_manager_forward.1} parent=11 // pred_fallthru
          _
        // Predicated region
        $region49: #{bert_manager_forward.1} parent=11 // pred_check
          %p532 = pneg %p317
        $region50: #{bert_manager_forward.1} parent=11 // pred_check_branch
          %534 = sbr.rel (%p532) target = $region52
        $region51: #{bert_manager_forward.1} parent=11 // pred_region
          _
        $region52: #{bert_manager_forward.1} parent=11 // pred_fallthru
          _
        // Predicated region
        $region53: #{bert_manager_forward.1} parent=11 // pred_check
          %p535 = pneg %p338
        $region54: #{bert_manager_forward.1} parent=11 // pred_check_branch
          %537 = sbr.rel (%p535) target = $region56
        $region55: #{bert_manager_forward.1} parent=11 // pred_region
          _
        $region56: #{bert_manager_forward.1} parent=11 // pred_fallthru
          _
        // Predicated region
        $region57: #{bert_manager_forward.1} parent=11 // pred_check
          %p538 = pneg %p359
        $region58: #{bert_manager_forward.1} parent=11 // pred_check_branch
          %540 = sbr.rel (%p538) target = $region60
        $region59: #{bert_manager_forward.1} parent=11 // pred_region
          _
        $region60: #{bert_manager_forward.1} parent=11 // pred_fallthru
          _
        // Predicated region
        $region61: #{bert_manager_forward.1} parent=11 // pred_check
          %p541 = pneg %p380
        $region62: #{bert_manager_forward.1} parent=11 // pred_check_branch
          %543 = sbr.rel (%p541) target = $region64
        $region63: #{bert_manager_forward.1} parent=11 // pred_region
          _
        $region64: #{bert_manager_forward.1} parent=11 // pred_fallthru
          _
        // Predicated region
        $region65: #{bert_manager_forward.1} parent=11 // pred_check
          %p544 = pneg %p401
        $region66: #{bert_manager_forward.1} parent=11 // pred_check_branch
          %546 = sbr.rel (%p544) target = $region68
        $region67: #{bert_manager_forward.1} parent=11 // pred_region
          _
        $region68: #{bert_manager_forward.1} parent=11 // pred_fallthru
          _
        // Predicated region
        $region69: #{bert_manager_forward.1} parent=11 // pred_check
          %p547 = pneg %p422
        $region70: #{bert_manager_forward.1} parent=11 // pred_check_branch
          %549 = sbr.rel (%p547) target = $region72
        $region71: #{bert_manager_forward.1} parent=11 // pred_region
          _
        $region72: #{bert_manager_forward.1} parent=11 // pred_fallthru
          _
        // Predicated region
        $region73: #{bert_manager_forward.1} parent=11 // pred_check
          %p550 = pneg %p443
        $region74: #{bert_manager_forward.1} parent=11 // pred_check_branch
          %552 = sbr.rel (%p550) target = $region76
        $region75: #{bert_manager_forward.1} parent=11 // pred_region
          _
        $region76: #{bert_manager_forward.1} parent=11 // pred_fallthru
          _
        // Predicated region
        $region77: #{bert_manager_forward.1} parent=11 // pred_check
          %p553 = pneg %p464
        $region78: #{bert_manager_forward.1} parent=11 // pred_check_branch
          %555 = sbr.rel (%p553) target = $region80
        $region79: #{bert_manager_forward.1} parent=11 // pred_region
          _
        $region80: #{bert_manager_forward.1} parent=11 // pred_fallthru
          _
      $region12: #{bert_manager_forward.1} parent=5 // pred_fallthru
        _
      %p556 = scmp.lt.s32.totalorder %s29, 8
      // Predicated region
      $region81: #{bert_manager_forward.1} parent=5 // pred_check
        %p557 = pneg %p556
      $region82: #{bert_manager_forward.1} parent=5 // pred_check_branch
        %559 = sbr.rel (%p557) target = $region84
      $region83: #{bert_manager_forward.1} parent=5 // pred_region
        // Predicated region
        $region85: #{bert_manager_forward.1} parent=83 // pred_check
          %p560 = pneg %p49
        $region86: #{bert_manager_forward.1} parent=83 // pred_check_branch
          %562 = sbr.rel (%p560) target = $region88
        $region87: #{bert_manager_forward.1} parent=83 // pred_region
          %p563 = scmp.lt.s32.totalorder %s29, 7
          %s564 = scalar_select %p563, %s29, 7
          %s565 = smul.addr %s564, 8
          %s566 = scalar_lea.vmem %s0, %s565
        $region88: #{bert_manager_forward.1} parent=83 // pred_fallthru
          _
        // Predicated region
        $region89: #{bert_manager_forward.1} parent=83 // pred_check
          %p567 = pneg %p75
        $region90: #{bert_manager_forward.1} parent=83 // pred_check_branch
          %569 = sbr.rel (%p567) target = $region92
        $region91: #{bert_manager_forward.1} parent=83 // pred_region
          %p570 = scmp.lt.s32.totalorder %s29, 7
          %s571 = scalar_select %p570, %s29, 7
          %s572 = scalar_lea.vmem %s1, %s571
        $region92: #{bert_manager_forward.1} parent=83 // pred_fallthru
          _
        // Predicated region
        $region93: #{bert_manager_forward.1} parent=83 // pred_check
          %p573 = pneg %p101
        $region94: #{bert_manager_forward.1} parent=83 // pred_check_branch
          %575 = sbr.rel (%p573) target = $region96
        $region95: #{bert_manager_forward.1} parent=83 // pred_region
          %p576 = scmp.lt.s32.totalorder %s29, 7
          %s577 = scalar_select %p576, %s29, 7
          %s578 = smul.addr %s577, 8
          %s579 = scalar_lea.vmem %s2, %s578
        $region96: #{bert_manager_forward.1} parent=83 // pred_fallthru
          _
      $region84: #{bert_manager_forward.1} parent=5 // pred_fallthru
        _
      %p580 = scmp.le.s32.totalorder 1, %s29
      %p581 = scmp.lt.s32.totalorder %s29, 9
      %p582 = pnand %p580, %p581
      %p583 = pneg %p582
      // Predicated region
      $region97: #{bert_manager_forward.1} parent=5 // pred_check
        _
      $region98: #{bert_manager_forward.1} parent=5 // pred_check_branch
        %585 = sbr.rel (%p582) target = $region100
      $region99: #{bert_manager_forward.1} parent=5 // pred_region
        %s586 = ssub.s32 %s29, 1
        %p587 = scmp.lt.s32.totalorder %s34, 7
        %s588 = scalar_select %p587, %s34, 7
        %s589 = smul.addr %s588, 8
        %s590 = scalar_lea.vmem %s0, %s589
        %p591 = pneg %p55
        %p592 = pneg %p52
        %p593 = scmp.lt.s32.totalorder %s34, 7
        %s594 = scalar_select %p593, %s34, 7
        %s595 = scalar_lea.vmem %s1, %s594
        %p596 = pneg %p81
        %p597 = pneg %p78
        %p598 = scmp.lt.s32.totalorder %s34, 7
        %s599 = scalar_select %p598, %s34, 7
        %s600 = smul.addr %s599, 8
        %s601 = scalar_lea.vmem %s2, %s600
        %p602 = pneg %p107
        %p603 = pneg %p104
        %p604 = pneg %p128
        %p605 = pneg %p125
        %p606 = pneg %p149
        %p607 = pneg %p146
        %p608 = pneg %p170
        %p609 = pneg %p167
        %p610 = pneg %p191
        %p611 = pneg %p188
        %p612 = pneg %p212
        %p613 = pneg %p209
        %p614 = pneg %p233
        %p615 = pneg %p230
        %p616 = pneg %p254
        %p617 = pneg %p251
        %p618 = pneg %p275
        %p619 = pneg %p272
        %p620 = pneg %p296
        %p621 = pneg %p293
        %p622 = pneg %p317
        %p623 = pneg %p314
        %p624 = pneg %p338
        %p625 = pneg %p335
        %p626 = pneg %p359
        %p627 = pneg %p356
        %p628 = pneg %p380
        %p629 = pneg %p377
        %p630 = pneg %p401
        %p631 = pneg %p398
        %p632 = pneg %p422
        %p633 = pneg %p419
        %p634 = pneg %p443
        %p635 = pneg %p440
        %p636 = pneg %p464
        %p637 = pneg %p461
        %p638 = pneg %p490
        %p639 = pneg %p487
        %s640 = sand.u32 %s477, 1
        %s641 = scalar_lea.sflag [#allocation3], %s640
        %s642 = sand.u32 %s477, 1
        %s643 = scalar_lea.vmem [#allocation2], %s642
        %p644 = scmp.lt.s32.totalorder %s34, 7
        %s645 = scalar_select %p644, %s34, 7
        %s646 = smul.addr %s645, 8
        %s647 = scalar_lea.vmem %s0, %s646
        %p648 = scmp.lt.s32.totalorder %s34, 7
        %s649 = scalar_select %p648, %s34, 7
        %s650 = scalar_lea.vmem %s1, %s649
        %p651 = scmp.lt.s32.totalorder %s34, 7
        %s652 = scalar_select %p651, %s34, 7
        %s653 = smul.addr %s652, 8
        %s654 = scalar_lea.vmem %s2, %s653
        %v656 = vld [vmem:[%s647] sm:$0xff]
        %v657 = vld [vmem:[%s3] sm:$0xff]
        %v658 = vadd.f32 %v656, %v657
        %vm659 = vcmask 261120
        %v660 = vsel %vm659, %v658, 0.0
        %661 = vadd.xlane.f32.xlu0 %v660
        %v662 = vpop.xlane.xlu0 %661
        %v663 = vrcp.pop 32.0
        %v664 = vmul.f32 %v662, %v663
        %v665 = vsub.f32 %v658, %v664
        %v666 = vmul.f32 %v665, %v665
        %v667 = vsel %vm659, %v666, 0.0
        %668 = vadd.xlane.f32.xlu0 %v667
        %v669 = vpop.xlane.xlu0 %668
        %v670 = vmul.f32 %v669, %v663
        %v671 = vadd.f32 %v670, 1e-12
        %v672 = vrsqrt.pop %v671
        %v673 = vmul.f32 %v665, %v672
        %v674 = vld [vmem:[%s4] sm:$0x1]
        %v676 = vlaneseq
        %v677 = vshrl.u32 %v676, 7
        %v678 = vsub.s32 0, %v677
        %v679 = vrot.slane %v674, %v678
        %v681 = vmul.f32 %v673, %v679
        %v682 = vld [vmem:[%s5] sm:$0x1]
        %v684 = vlaneseq
        %v685 = vshrl.u32 %v684, 7
        %v686 = vsub.s32 0, %v685
        %v687 = vrot.slane %v682, %v686
        %v689 = vadd.f32 %v681, %v687
        %v690 = vpack.c.bf16 %v689, %v689
        %v691 = vld [vmem:[%s6] sm:$0xf]
        %v692 = vld [vmem:[%s6 + $0x4] sm:$0xf]
        %v693 = vld [vmem:[%s6 + $0x8] sm:$0xf]
        %v694 = vld [vmem:[%s6 + $0xc] sm:$0xf]
        %v695 = vld [vmem:[%s7] sm:$0x1]
        %v697 = vlaneseq
        %v698 = vshrl.u32 %v697, 7
        %v699 = vsub.s32 0, %v698
        %v700 = vrot.slane %v695, %v699
        %v706 = vunpack.c.l.b16 %v691
        %v707 = vunpack.c.l.b16 %v692
        %v708 = vunpack.c.l.b16 %v693
        %v709 = vunpack.c.l.b16 %v694
        %v710 = vpack.c.b16 %v707, %v706
        %v711 = vpack.c.b16 %v709, %v708
        %v715 = vsel %vm659, %v690, 0
        %717 = vmatprep.subr.bf16.mxu0 0
        %718 = vmatpush1.bf16.msra.mxu0 %v710
        %719 = vmatprep.subr.bf16.mxu0 0
        %720 = vmatpush1.bf16.msra.mxu0 %v711
        %721 = vmatprep.subr.bf16.mxu0 0
        %722 = vmatpush1.bf16.msra.mxu0 0
        %723 = vmatprep.subr.bf16.mxu0 0
        %724 = vmatpush1.bf16.msra.mxu0 0
        %725 = vmatprep.subr.bf16.mxu0 0
        %726 = vmatpush1.bf16.msra.mxu0 0
        %727 = vmatprep.subr.bf16.mxu0 0
        %728 = vmatpush1.bf16.msra.mxu0 0
        %729 = vmatprep.subr.bf16.mxu0 0
        %730 = vmatpush1.bf16.msra.mxu0 0
        %731 = vmatprep.subr.bf16.mxu0 0
        %732 = vmatpush1.bf16.msra.mxu0 0
        %733 = vmatprep.subr.bf16.mxu0 0
        %734 = vmatpush1.bf16.msra.mxu0 0
        %735 = vmatprep.subr.bf16.mxu0 0
        %736 = vmatpush1.bf16.msra.mxu0 0
        %737 = vmatprep.subr.bf16.mxu0 0
        %738 = vmatpush1.bf16.msra.mxu0 0
        %739 = vmatprep.subr.bf16.mxu0 0
        %740 = vmatpush1.bf16.msra.mxu0 0
        %741 = vmatprep.subr.bf16.mxu0 0
        %742 = vmatpush1.bf16.msra.mxu0 0
        %743 = vmatprep.subr.bf16.mxu0 0
        %744 = vmatpush1.bf16.msra.mxu0 0
        %745 = vmatprep.subr.bf16.mxu0 0
        %746 = vmatpush1.bf16.msra.mxu0 0
        %747 = vmatprep.subr.bf16.mxu0 0
        %748 = vmatpush1.bf16.msra.mxu0 0
        %749 = vmatprep.mubr.bf16.mxu0 0
        %750 = vmatmul.mubr.bf16.gmra.mrb[0].mxu0 %v715
        %v751 = vpop.f32.mrb[0].mxu0
        %v752 = vadd.f32 %v700, %v751
        %v753 = vpop.f32.mrb[0].mxu0
        %v754 = vpop.f32.mrb[0].mxu0
        %v755 = vpop.f32.mrb[0].mxu0
        %756 = vdwg.mxu0
        %v757 = vld [vmem:[%s650] sm:$0x1]
        %v758 = vsub.f32 %v757, 1.0
        %v759 = vmul.f32 %v758, 1e+09
        %v760 = vpack.c.bf16 %v752, %v752
        %762 = vrot.lane.b32.xlu0 %v760, 96
        %v763 = vpop.permute.xlu0 %762
        %vm764 = vcmask 64512
        %v766 = vsel %vm764, %v760, 0
        %v769 = vsel %vm764, %v763, 0
        %771 = vmatprep.subr.bf16.mxu0 0
        %772 = vmatpush1.bf16.xpose.msra.mxu0 %v769
        %773 = vmatprep.subr.bf16.mxu0 0
        %774 = vmatpush1.bf16.xpose.msra.mxu0 0
        %775 = vmatprep.subr.bf16.mxu0 0
        %776 = vmatpush1.bf16.xpose.msra.mxu0 0
        %777 = vmatprep.subr.bf16.mxu0 0
        %778 = vmatpush1.bf16.xpose.msra.mxu0 0
        %779 = vmatprep.subr.bf16.mxu0 0
        %780 = vmatpush1.bf16.xpose.msra.mxu0 0
        %781 = vmatprep.subr.bf16.mxu0 0
        %782 = vmatpush1.bf16.xpose.msra.mxu0 0
        %783 = vmatprep.subr.bf16.mxu0 0
        %784 = vmatpush1.bf16.xpose.msra.mxu0 0
        %785 = vmatprep.subr.bf16.mxu0 0
        %786 = vmatpush1.bf16.xpose.msra.mxu0 0
        %787 = vmatprep.subr.bf16.mxu0 0
        %788 = vmatpush1.bf16.xpose.msra.mxu0 0
        %789 = vmatprep.subr.bf16.mxu0 0
        %790 = vmatpush1.bf16.xpose.msra.mxu0 0
        %791 = vmatprep.subr.bf16.mxu0 0
        %792 = vmatpush1.bf16.xpose.msra.mxu0 0
        %793 = vmatprep.subr.bf16.mxu0 0
        %794 = vmatpush1.bf16.xpose.msra.mxu0 0
        %795 = vmatprep.subr.bf16.mxu0 0
        %796 = vmatpush1.bf16.xpose.msra.mxu0 0
        %797 = vmatprep.subr.bf16.mxu0 0
        %798 = vmatpush1.bf16.xpose.msra.mxu0 0
        %799 = vmatprep.subr.bf16.mxu0 0
        %800 = vmatpush1.bf16.xpose.msra.mxu0 0
        %801 = vmatprep.subr.bf16.mxu0 0
        %802 = vmatpush1.bf16.xpose.msra.mxu0 0
        %803 = vmatprep.mubr.bf16.mxu0 0
        %804 = vmatmul.mubr.bf16.gmra.mrb[0].mxu0 %v766
        %v805 = vpop.f32.mrb[0].mxu0
        %v806 = vadd.f32 0.0, %v805
        %v807 = vpop.f32.mrb[0].mxu0
        %v808 = vpop.f32.mrb[0].mxu0
        %v809 = vpop.f32.mrb[0].mxu0
        %810 = vdwg.mxu0
        %v811 = vmul.f32 %v806, 0.35355338
        %v813 = vlaneseq
        %v814 = vshrl.u32 %v813, 7
        %v815 = vsub.s32 0, %v814
        %v816 = vrot.slane %v759, %v815
        %v818 = vadd.f32 %v811, %v816
        %v819 = vsel %vm764, %v818, -inf
        %820 = vmax.xlane.f32.xlu0 %v819
        %v821 = vpop.xlane.xlu0 %820
        %v822 = vsub.f32 %v818, %v821
        %v823 = vmul.f32 %v822, 1.442695
        %v824 = vpow.pop %v823
        %v825 = vsel %vm764, %v824, 0.0
        %826 = vadd.xlane.f32.xlu0 %v825
        %v827 = vpop.xlane.xlu0 %826
        %v828 = vrcp.pop %v827
        %v829 = vmul.f32 %v824, %v828
        %v830 = vpack.c.bf16 %v829, %v829
        %831 = vrot.lane.b32.xlu0 %v760, 64
        %v832 = vpop.permute.xlu0 %831
        %v834 = vsel %vm764, %v830, 0
        %vm836 = vcmask 1043456
        %v838 = vsel %vm836, %v832, 0
        %840 = vmatprep.subr.bf16.mxu0 0
        %841 = vmatpush1.bf16.msra.mxu0 %v838
        %842 = vmatprep.subr.bf16.mxu0 0
        %843 = vmatpush1.bf16.msra.mxu0 0
        %844 = vmatprep.subr.bf16.mxu0 0
        %845 = vmatpush1.bf16.msra.mxu0 0
        %846 = vmatprep.subr.bf16.mxu0 0
        %847 = vmatpush1.bf16.msra.mxu0 0
        %848 = vmatprep.subr.bf16.mxu0 0
        %849 = vmatpush1.bf16.msra.mxu0 0
        %850 = vmatprep.subr.bf16.mxu0 0
        %851 = vmatpush1.bf16.msra.mxu0 0
        %852 = vmatprep.subr.bf16.mxu0 0
        %853 = vmatpush1.bf16.msra.mxu0 0
        %854 = vmatprep.subr.bf16.mxu0 0
        %855 = vmatpush1.bf16.msra.mxu0 0
        %856 = vmatprep.subr.bf16.mxu0 0
        %857 = vmatpush1.bf16.msra.mxu0 0
        %858 = vmatprep.subr.bf16.mxu0 0
        %859 = vmatpush1.bf16.msra.mxu0 0
        %860 = vmatprep.subr.bf16.mxu0 0
        %861 = vmatpush1.bf16.msra.mxu0 0
        %862 = vmatprep.subr.bf16.mxu0 0
        %863 = vmatpush1.bf16.msra.mxu0 0
        %864 = vmatprep.subr.bf16.mxu0 0
        %865 = vmatpush1.bf16.msra.mxu0 0
        %866 = vmatprep.subr.bf16.mxu0 0
        %867 = vmatpush1.bf16.msra.mxu0 0
        %868 = vmatprep.subr.bf16.mxu0 0
        %869 = vmatpush1.bf16.msra.mxu0 0
        %870 = vmatprep.subr.bf16.mxu0 0
        %871 = vmatpush1.bf16.msra.mxu0 0
        %872 = vmatprep.mubr.bf16.mxu0 0
        %873 = vmatmul.mubr.bf16.gmra.mrb[0].mxu0 %v834
        %v874 = vpop.f32.mrb[0].mxu0
        %v875 = vadd.f32 0.0, %v874
        %v876 = vpop.f32.mrb[0].mxu0
        %v877 = vpop.f32.mrb[0].mxu0
        %v878 = vpop.f32.mrb[0].mxu0
        %879 = vdwg.mxu0
        %880 = vrot.lane.b32.xlu0 %v760, 120
        %v881 = vpop.permute.xlu0 %880
        %882 = vrot.lane.b32.xlu0 %v760, 88
        %v883 = vpop.permute.xlu0 %882
        %v885 = vsel %vm764, %v881, 0
        %v888 = vsel %vm764, %v883, 0
        %890 = vmatprep.subr.bf16.mxu0 0
        %891 = vmatpush1.bf16.xpose.msra.mxu0 %v888
        %892 = vmatprep.subr.bf16.mxu0 0
        %893 = vmatpush1.bf16.xpose.msra.mxu0 0
        %894 = vmatprep.subr.bf16.mxu0 0
        %895 = vmatpush1.bf16.xpose.msra.mxu0 0
        %896 = vmatprep.subr.bf16.mxu0 0
        %897 = vmatpush1.bf16.xpose.msra.mxu0 0
        %898 = vmatprep.subr.bf16.mxu0 0
        %899 = vmatpush1.bf16.xpose.msra.mxu0 0
        %900 = vmatprep.subr.bf16.mxu0 0
        %901 = vmatpush1.bf16.xpose.msra.mxu0 0
        %902 = vmatprep.subr.bf16.mxu0 0
        %903 = vmatpush1.bf16.xpose.msra.mxu0 0
        %904 = vmatprep.subr.bf16.mxu0 0
        %905 = vmatpush1.bf16.xpose.msra.mxu0 0
        %906 = vmatprep.subr.bf16.mxu0 0
        %907 = vmatpush1.bf16.xpose.msra.mxu0 0
        %908 = vmatprep.subr.bf16.mxu0 0
        %909 = vmatpush1.bf16.xpose.msra.mxu0 0
        %910 = vmatprep.subr.bf16.mxu0 0
        %911 = vmatpush1.bf16.xpose.msra.mxu0 0
        %912 = vmatprep.subr.bf16.mxu0 0
        %913 = vmatpush1.bf16.xpose.msra.mxu0 0
        %914 = vmatprep.subr.bf16.mxu0 0
        %915 = vmatpush1.bf16.xpose.msra.mxu0 0
        %916 = vmatprep.subr.bf16.mxu0 0
        %917 = vmatpush1.bf16.xpose.msra.mxu0 0
        %918 = vmatprep.subr.bf16.mxu0 0
        %919 = vmatpush1.bf16.xpose.msra.mxu0 0
        %920 = vmatprep.subr.bf16.mxu0 0
        %921 = vmatpush1.bf16.xpose.msra.mxu0 0
        %922 = vmatprep.mubr.bf16.mxu0 0
        %923 = vmatmul.mubr.bf16.gmra.mrb[0].mxu0 %v885
        %v924 = vpop.f32.mrb[0].mxu0
        %v925 = vadd.f32 0.0, %v924
        %v926 = vpop.f32.mrb[0].mxu0
        %v927 = vpop.f32.mrb[0].mxu0
        %v928 = vpop.f32.mrb[0].mxu0
        %929 = vdwg.mxu0
        %v930 = vmul.f32 %v925, 0.35355338
        %v931 = vadd.f32 %v930, %v816
        %v932 = vsel %vm764, %v931, -inf
        %933 = vmax.xlane.f32.xlu0 %v932
        %v934 = vpop.xlane.xlu0 %933
        %v935 = vsub.f32 %v931, %v934
        %v936 = vmul.f32 %v935, 1.442695
        %v937 = vpow.pop %v936
        %v938 = vsel %vm764, %v937, 0.0
        %939 = vadd.xlane.f32.xlu0 %v938
        %v940 = vpop.xlane.xlu0 %939
        %v941 = vrcp.pop %v940
        %v942 = vmul.f32 %v937, %v941
        %v943 = vpack.c.bf16 %v942, %v942
        %944 = vrot.lane.b32.xlu0 %v760, 56
        %v945 = vpop.permute.xlu0 %944
        %v947 = vsel %vm764, %v943, 0
        %v950 = vsel %vm836, %v945, 0
        %952 = vmatprep.subr.bf16.mxu0 0
        %953 = vmatpush1.bf16.msra.mxu0 %v950
        %954 = vmatprep.subr.bf16.mxu0 0
        %955 = vmatpush1.bf16.msra.mxu0 0
        %956 = vmatprep.subr.bf16.mxu0 0
        %957 = vmatpush1.bf16.msra.mxu0 0
        %958 = vmatprep.subr.bf16.mxu0 0
        %959 = vmatpush1.bf16.msra.mxu0 0
        %960 = vmatprep.subr.bf16.mxu0 0
        %961 = vmatpush1.bf16.msra.mxu0 0
        %962 = vmatprep.subr.bf16.mxu0 0
        %963 = vmatpush1.bf16.msra.mxu0 0
        %964 = vmatprep.subr.bf16.mxu0 0
        %965 = vmatpush1.bf16.msra.mxu0 0
        %966 = vmatprep.subr.bf16.mxu0 0
        %967 = vmatpush1.bf16.msra.mxu0 0
        %968 = vmatprep.subr.bf16.mxu0 0
        %969 = vmatpush1.bf16.msra.mxu0 0
        %970 = vmatprep.subr.bf16.mxu0 0
        %971 = vmatpush1.bf16.msra.mxu0 0
        %972 = vmatprep.subr.bf16.mxu0 0
        %973 = vmatpush1.bf16.msra.mxu0 0
        %974 = vmatprep.subr.bf16.mxu0 0
        %975 = vmatpush1.bf16.msra.mxu0 0
        %976 = vmatprep.subr.bf16.mxu0 0
        %977 = vmatpush1.bf16.msra.mxu0 0
        %978 = vmatprep.subr.bf16.mxu0 0
        %979 = vmatpush1.bf16.msra.mxu0 0
        %980 = vmatprep.subr.bf16.mxu0 0
        %981 = vmatpush1.bf16.msra.mxu0 0
        %982 = vmatprep.subr.bf16.mxu0 0
        %983 = vmatpush1.bf16.msra.mxu0 0
        %984 = vmatprep.mubr.bf16.mxu0 0
        %985 = vmatmul.mubr.bf16.gmra.mrb[0].mxu0 %v947
        %v986 = vpop.f32.mrb[0].mxu0
        %v987 = vadd.f32 0.0, %v986
        %v988 = vpop.f32.mrb[0].mxu0
        %v989 = vpop.f32.mrb[0].mxu0
        %v990 = vpop.f32.mrb[0].mxu0
        %991 = vdwg.mxu0
        %992 = vrot.lane.b32.xlu0 %v760, 112
        %v993 = vpop.permute.xlu0 %992
        %994 = vrot.lane.b32.xlu0 %v760, 80
        %v995 = vpop.permute.xlu0 %994
        %v997 = vsel %vm764, %v993, 0
        %v1000 = vsel %vm764, %v995, 0
        %1002 = vmatprep.subr.bf16.mxu0 0
        %1003 = vmatpush1.bf16.xpose.msra.mxu0 %v1000
        %1004 = vmatprep.subr.bf16.mxu0 0
        %1005 = vmatpush1.bf16.xpose.msra.mxu0 0
        %1006 = vmatprep.subr.bf16.mxu0 0
        %1007 = vmatpush1.bf16.xpose.msra.mxu0 0
        %1008 = vmatprep.subr.bf16.mxu0 0
        %1009 = vmatpush1.bf16.xpose.msra.mxu0 0
        %1010 = vmatprep.subr.bf16.mxu0 0
        %1011 = vmatpush1.bf16.xpose.msra.mxu0 0
        %1012 = vmatprep.subr.bf16.mxu0 0
        %1013 = vmatpush1.bf16.xpose.msra.mxu0 0
        %1014 = vmatprep.subr.bf16.mxu0 0
        %1015 = vmatpush1.bf16.xpose.msra.mxu0 0
        %1016 = vmatprep.subr.bf16.mxu0 0
        %1017 = vmatpush1.bf16.xpose.msra.mxu0 0
        %1018 = vmatprep.subr.bf16.mxu0 0
        %1019 = vmatpush1.bf16.xpose.msra.mxu0 0
        %1020 = vmatprep.subr.bf16.mxu0 0
        %1021 = vmatpush1.bf16.xpose.msra.mxu0 0
        %1022 = vmatprep.subr.bf16.mxu0 0
        %1023 = vmatpush1.bf16.xpose.msra.mxu0 0
        %1024 = vmatprep.subr.bf16.mxu0 0
        %1025 = vmatpush1.bf16.xpose.msra.mxu0 0
        %1026 = vmatprep.subr.bf16.mxu0 0
        %1027 = vmatpush1.bf16.xpose.msra.mxu0 0
        %1028 = vmatprep.subr.bf16.mxu0 0
        %1029 = vmatpush1.bf16.xpose.msra.mxu0 0
        %1030 = vmatprep.subr.bf16.mxu0 0
        %1031 = vmatpush1.bf16.xpose.msra.mxu0 0
        %1032 = vmatprep.subr.bf16.mxu0 0
        %1033 = vmatpush1.bf16.xpose.msra.mxu0 0
        %1034 = vmatprep.mubr.bf16.mxu0 0
        %1035 = vmatmul.mubr.bf16.gmra.mrb[0].mxu0 %v997
        %v1036 = vpop.f32.mrb[0].mxu0
        %v1037 = vadd.f32 0.0, %v1036
        %v1038 = vpop.f32.mrb[0].mxu0
        %v1039 = vpop.f32.mrb[0].mxu0
        %v1040 = vpop.f32.mrb[0].mxu0
        %1041 = vdwg.mxu0
        %v1042 = vmul.f32 %v1037, 0.35355338
        %v1043 = vadd.f32 %v1042, %v816
        %v1044 = vsel %vm764, %v1043, -inf
        %1045 = vmax.xlane.f32.xlu0 %v1044
        %v1046 = vpop.xlane.xlu0 %1045
        %v1047 = vsub.f32 %v1043, %v1046
        %v1048 = vmul.f32 %v1047, 1.442695
        %v1049 = vpow.pop %v1048
        %v1050 = vsel %vm764, %v1049, 0.0
        %1051 = vadd.xlane.f32.xlu0 %v1050
        %v1052 = vpop.xlane.xlu0 %1051
        %v1053 = vrcp.pop %v1052
        %v1054 = vmul.f32 %v1049, %v1053
        %v1055 = vpack.c.bf16 %v1054, %v1054
        %1056 = vrot.lane.b32.xlu0 %v760, 48
        %v1057 = vpop.permute.xlu0 %1056
        %v1059 = vsel %vm764, %v1055, 0
        %v1062 = vsel %vm836, %v1057, 0
        %1064 = vmatprep.subr.bf16.mxu0 0
        %1065 = vmatpush1.bf16.msra.mxu0 %v1062
        %1066 = vmatprep.subr.bf16.mxu0 0
        %1067 = vmatpush1.bf16.msra.mxu0 0
        %1068 = vmatprep.subr.bf16.mxu0 0
        %1069 = vmatpush1.bf16.msra.mxu0 0
        %1070 = vmatprep.subr.bf16.mxu0 0
        %1071 = vmatpush1.bf16.msra.mxu0 0
        %1072 = vmatprep.subr.bf16.mxu0 0
        %1073 = vmatpush1.bf16.msra.mxu0 0
        %1074 = vmatprep.subr.bf16.mxu0 0
        %1075 = vmatpush1.bf16.msra.mxu0 0
        %1076 = vmatprep.subr.bf16.mxu0 0
        %1077 = vmatpush1.bf16.msra.mxu0 0
        %1078 = vmatprep.subr.bf16.mxu0 0
        %1079 = vmatpush1.bf16.msra.mxu0 0
        %1080 = vmatprep.subr.bf16.mxu0 0
        %1081 = vmatpush1.bf16.msra.mxu0 0
        %1082 = vmatprep.subr.bf16.mxu0 0
        %1083 = vmatpush1.bf16.msra.mxu0 0
        %1084 = vmatprep.subr.bf16.mxu0 0
        %1085 = vmatpush1.bf16.msra.mxu0 0
        %1086 = vmatprep.subr.bf16.mxu0 0
        %1087 = vmatpush1.bf16.msra.mxu0 0
        %1088 = vmatprep.subr.bf16.mxu0 0
        %1089 = vmatpush1.bf16.msra.mxu0 0
        %1090 = vmatprep.subr.bf16.mxu0 0
        %1091 = vmatpush1.bf16.msra.mxu0 0
        %1092 = vmatprep.subr.bf16.mxu0 0
        %1093 = vmatpush1.bf16.msra.mxu0 0
        %1094 = vmatprep.subr.bf16.mxu0 0
        %1095 = vmatpush1.bf16.msra.mxu0 0
        %1096 = vmatprep.mubr.bf16.mxu0 0
        %1097 = vmatmul.mubr.bf16.gmra.mrb[0].mxu0 %v1059
        %v1098 = vpop.f32.mrb[0].mxu0
        %v1099 = vadd.f32 0.0, %v1098
        %v1100 = vpop.f32.mrb[0].mxu0
        %v1101 = vpop.f32.mrb[0].mxu0
        %v1102 = vpop.f32.mrb[0].mxu0
        %1103 = vdwg.mxu0
        %1104 = vrot.lane.b32.xlu0 %v760, 104
        %v1105 = vpop.permute.xlu0 %1104
        %1106 = vrot.lane.b32.xlu0 %v760, 72
        %v1107 = vpop.permute.xlu0 %1106
        %v1109 = vsel %vm764, %v1105, 0
        %v1112 = vsel %vm764, %v1107, 0
        %1114 = vmatprep.subr.bf16.mxu0 0
        %1115 = vmatpush1.bf16.xpose.msra.mxu0 %v1112
        %1116 = vmatprep.subr.bf16.mxu0 0
        %1117 = vmatpush1.bf16.xpose.msra.mxu0 0
        %1118 = vmatprep.subr.bf16.mxu0 0
        %1119 = vmatpush1.bf16.xpose.msra.mxu0 0
        %1120 = vmatprep.subr.bf16.mxu0 0
        %1121 = vmatpush1.bf16.xpose.msra.mxu0 0
        %1122 = vmatprep.subr.bf16.mxu0 0
        %1123 = vmatpush1.bf16.xpose.msra.mxu0 0
        %1124 = vmatprep.subr.bf16.mxu0 0
        %1125 = vmatpush1.bf16.xpose.msra.mxu0 0
        %1126 = vmatprep.subr.bf16.mxu0 0
        %1127 = vmatpush1.bf16.xpose.msra.mxu0 0
        %1128 = vmatprep.subr.bf16.mxu0 0
        %1129 = vmatpush1.bf16.xpose.msra.mxu0 0
        %1130 = vmatprep.subr.bf16.mxu0 0
        %1131 = vmatpush1.bf16.xpose.msra.mxu0 0
        %1132 = vmatprep.subr.bf16.mxu0 0
        %1133 = vmatpush1.bf16.xpose.msra.mxu0 0
        %1134 = vmatprep.subr.bf16.mxu0 0
        %1135 = vmatpush1.bf16.xpose.msra.mxu0 0
        %1136 = vmatprep.subr.bf16.mxu0 0
        %1137 = vmatpush1.bf16.xpose.msra.mxu0 0
        %1138 = vmatprep.subr.bf16.mxu0 0
        %1139 = vmatpush1.bf16.xpose.msra.mxu0 0
        %1140 = vmatprep.subr.bf16.mxu0 0
        %1141 = vmatpush1.bf16.xpose.msra.mxu0 0
        %1142 = vmatprep.subr.bf16.mxu0 0
        %1143 = vmatpush1.bf16.xpose.msra.mxu0 0
        %1144 = vmatprep.subr.bf16.mxu0 0
        %1145 = vmatpush1.bf16.xpose.msra.mxu0 0
        %1146 = vmatprep.mubr.bf16.mxu0 0
        %1147 = vmatmul.mubr.bf16.gmra.mrb[0].mxu0 %v1109
        %v1148 = vpop.f32.mrb[0].mxu0
        %v1149 = vadd.f32 0.0, %v1148
        %v1150 = vpop.f32.mrb[0].mxu0
        %v1151 = vpop.f32.mrb[0].mxu0
        %v1152 = vpop.f32.mrb[0].mxu0
        %1153 = vdwg.mxu0
        %v1154 = vmul.f32 %v1149, 0.35355338
        %v1155 = vadd.f32 %v1154, %v816
        %v1156 = vsel %vm764, %v1155, -inf
        %1157 = vmax.xlane.f32.xlu0 %v1156
        %v1158 = vpop.xlane.xlu0 %1157
        %v1159 = vsub.f32 %v1155, %v1158
        %v1160 = vmul.f32 %v1159, 1.442695
        %v1161 = vpow.pop %v1160
        %v1162 = vsel %vm764, %v1161, 0.0
        %1163 = vadd.xlane.f32.xlu0 %v1162
        %v1164 = vpop.xlane.xlu0 %1163
        %v1165 = vrcp.pop %v1164
        %v1166 = vmul.f32 %v1161, %v1165
        %v1167 = vpack.c.bf16 %v1166, %v1166
        %1168 = vrot.lane.b32.xlu0 %v760, 40
        %v1169 = vpop.permute.xlu0 %1168
        %v1171 = vsel %vm764, %v1167, 0
        %v1174 = vsel %vm836, %v1169, 0
        %1176 = vmatprep.subr.bf16.mxu0 0
        %1177 = vmatpush1.bf16.msra.mxu0 %v1174
        %1178 = vmatprep.subr.bf16.mxu0 0
        %1179 = vmatpush1.bf16.msra.mxu0 0
        %1180 = vmatprep.subr.bf16.mxu0 0
        %1181 = vmatpush1.bf16.msra.mxu0 0
        %1182 = vmatprep.subr.bf16.mxu0 0
        %1183 = vmatpush1.bf16.msra.mxu0 0
        %1184 = vmatprep.subr.bf16.mxu0 0
        %1185 = vmatpush1.bf16.msra.mxu0 0
        %1186 = vmatprep.subr.bf16.mxu0 0
        %1187 = vmatpush1.bf16.msra.mxu0 0
        %1188 = vmatprep.subr.bf16.mxu0 0
        %1189 = vmatpush1.bf16.msra.mxu0 0
        %1190 = vmatprep.subr.bf16.mxu0 0
        %1191 = vmatpush1.bf16.msra.mxu0 0
        %1192 = vmatprep.subr.bf16.mxu0 0
        %1193 = vmatpush1.bf16.msra.mxu0 0
        %1194 = vmatprep.subr.bf16.mxu0 0
        %1195 = vmatpush1.bf16.msra.mxu0 0
        %1196 = vmatprep.subr.bf16.mxu0 0
        %1197 = vmatpush1.bf16.msra.mxu0 0
        %1198 = vmatprep.subr.bf16.mxu0 0
        %1199 = vmatpush1.bf16.msra.mxu0 0
        %1200 = vmatprep.subr.bf16.mxu0 0
        %1201 = vmatpush1.bf16.msra.mxu0 0
        %1202 = vmatprep.subr.bf16.mxu0 0
        %1203 = vmatpush1.bf16.msra.mxu0 0
        %1204 = vmatprep.subr.bf16.mxu0 0
        %1205 = vmatpush1.bf16.msra.mxu0 0
        %1206 = vmatprep.subr.bf16.mxu0 0
        %1207 = vmatpush1.bf16.msra.mxu0 0
        %1208 = vmatprep.mubr.bf16.mxu0 0
        %1209 = vmatmul.mubr.bf16.gmra.mrb[0].mxu0 %v1171
        %v1210 = vpop.f32.mrb[0].mxu0
        %v1211 = vadd.f32 0.0, %v1210
        %v1212 = vpop.f32.mrb[0].mxu0
        %v1213 = vpop.f32.mrb[0].mxu0
        %v1214 = vpop.f32.mrb[0].mxu0
        %1215 = vdwg.mxu0
        %1217 = vrot.lane.b32.xlu0 %v987, 8
        %v1218 = vpop.permute.xlu0 %1217
        %1221 = vrot.lane.b32.xlu0 %v1099, 16
        %v1222 = vpop.permute.xlu0 %1221
        %1225 = vrot.lane.b32.xlu0 %v1211, 24
        %v1226 = vpop.permute.xlu0 %1225
        %v1228 = vsel %vm764, %v875, %v1218
        %vm1229 = vcmask 130048
        %v1230 = vsel %vm1229, %v1228, %v1222
        %vm1231 = vcmask 195584
        %v1232 = vsel %vm1231, %v1230, %v1226
        %v1233 = vpack.c.bf16 %v1232, %v1232
        %v1234 = vld [vmem:[%s8] sm:$0xf]
        %v1235 = vld [vmem:[%s8 + $0x4] sm:$0xf]
        %v1236 = vld [vmem:[%s8 + $0x8] sm:$0xf]
        %v1237 = vld [vmem:[%s8 + $0xc] sm:$0xf]
        %v1238 = vld [vmem:[%s9] sm:$0x1]
        %v1240 = vlaneseq
        %v1241 = vshrl.u32 %v1240, 7
        %v1242 = vsub.s32 0, %v1241
        %v1243 = vrot.slane %v1238, %v1242
        %v1249 = vunpack.c.l.b16 %v1234
        %v1250 = vunpack.c.l.b16 %v1235
        %v1251 = vunpack.c.l.b16 %v1236
        %v1252 = vunpack.c.l.b16 %v1237
        %v1253 = vpack.c.b16 %v1250, %v1249
        %v1254 = vpack.c.b16 %v1252, %v1251
        %v1258 = vsel %vm659, %v1233, 0
        %1260 = vmatprep.subr.bf16.mxu0 0
        %1261 = vmatpush1.bf16.msra.mxu0 %v1253
        %1262 = vmatprep.subr.bf16.mxu0 0
        %1263 = vmatpush1.bf16.msra.mxu0 %v1254
        %1264 = vmatprep.subr.bf16.mxu0 0
        %1265 = vmatpush1.bf16.msra.mxu0 0
        %1266 = vmatprep.subr.bf16.mxu0 0
        %1267 = vmatpush1.bf16.msra.mxu0 0
        %1268 = vmatprep.subr.bf16.mxu0 0
        %1269 = vmatpush1.bf16.msra.mxu0 0
        %1270 = vmatprep.subr.bf16.mxu0 0
        %1271 = vmatpush1.bf16.msra.mxu0 0
        %1272 = vmatprep.subr.bf16.mxu0 0
        %1273 = vmatpush1.bf16.msra.mxu0 0
        %1274 = vmatprep.subr.bf16.mxu0 0
        %1275 = vmatpush1.bf16.msra.mxu0 0
        %1276 = vmatprep.subr.bf16.mxu0 0
        %1277 = vmatpush1.bf16.msra.mxu0 0
        %1278 = vmatprep.subr.bf16.mxu0 0
        %1279 = vmatpush1.bf16.msra.mxu0 0
        %1280 = vmatprep.subr.bf16.mxu0 0
        %1281 = vmatpush1.bf16.msra.mxu0 0
        %1282 = vmatprep.subr.bf16.mxu0 0
        %1283 = vmatpush1.bf16.msra.mxu0 0
        %1284 = vmatprep.subr.bf16.mxu0 0
        %1285 = vmatpush1.bf16.msra.mxu0 0
        %1286 = vmatprep.subr.bf16.mxu0 0
        %1287 = vmatpush1.bf16.msra.mxu0 0
        %1288 = vmatprep.subr.bf16.mxu0 0
        %1289 = vmatpush1.bf16.msra.mxu0 0
        %1290 = vmatprep.subr.bf16.mxu0 0
        %1291 = vmatpush1.bf16.msra.mxu0 0
        %1292 = vmatprep.mubr.bf16.mxu0 0
        %1293 = vmatmul.mubr.bf16.gmra.mrb[0].mxu0 %v1258
        %v1294 = vpop.f32.mrb[0].mxu0
        %v1295 = vadd.f32 %v1243, %v1294
        %v1296 = vpop.f32.mrb[0].mxu0
        %v1297 = vpop.f32.mrb[0].mxu0
        %v1298 = vpop.f32.mrb[0].mxu0
        %1299 = vdwg.mxu0
        %v1300 = vadd.f32 %v689, %v1295
        %v1301 = vsel %vm659, %v1300, 0.0
        %1302 = vadd.xlane.f32.xlu0 %v1301
        %v1303 = vpop.xlane.xlu0 %1302
        %v1304 = vmul.f32 %v1303, %v663
        %v1305 = vsub.f32 %v1300, %v1304
        %v1306 = vmul.f32 %v1305, %v1305
        %v1307 = vsel %vm659, %v1306, 0.0
        %1308 = vadd.xlane.f32.xlu0 %v1307
        %v1309 = vpop.xlane.xlu0 %1308
        %v1310 = vmul.f32 %v1309, %v663
        %v1311 = vadd.f32 %v1310, 1e-12
        %v1312 = vrsqrt.pop %v1311
        %v1313 = vmul.f32 %v1305, %v1312
        %v1314 = vld [vmem:[%s10] sm:$0x1]
        %v1316 = vlaneseq
        %v1317 = vshrl.u32 %v1316, 7
        %v1318 = vsub.s32 0, %v1317
        %v1319 = vrot.slane %v1314, %v1318
        %v1321 = vmul.f32 %v1313, %v1319
        %v1322 = vld [vmem:[%s11] sm:$0x1]
        %v1324 = vlaneseq
        %v1325 = vshrl.u32 %v1324, 7
        %v1326 = vsub.s32 0, %v1325
        %v1327 = vrot.slane %v1322, %v1326
        %v1329 = vadd.f32 %v1321, %v1327
        %v1330 = vpack.c.bf16 %v1329, %v1329
        %v1331 = vld [vmem:[%s12] sm:$0xf]
        %v1332 = vld [vmem:[%s12 + $0x4] sm:$0xf]
        %v1333 = vld [vmem:[%s12 + $0x8] sm:$0xf]
        %v1334 = vld [vmem:[%s12 + $0xc] sm:$0xf]
        %v1335 = vld [vmem:[%s13] sm:$0x1]
        %v1337 = vlaneseq
        %v1338 = vshrl.u32 %v1337, 7
        %v1339 = vsub.s32 0, %v1338
        %v1340 = vrot.slane %v1335, %v1339
        %v1346 = vunpack.c.l.b16 %v1331
        %v1347 = vunpack.c.l.b16 %v1332
        %v1348 = vunpack.c.l.b16 %v1333
        %v1349 = vunpack.c.l.b16 %v1334
        %v1350 = vpack.c.b16 %v1347, %v1346
        %v1351 = vpack.c.b16 %v1349, %v1348
        %v1355 = vsel %vm659, %v1330, 0
        %1357 = vmatprep.subr.bf16.mxu0 0
        %1358 = vmatpush1.bf16.msra.mxu0 %v1350
        %1359 = vmatprep.subr.bf16.mxu0 0
        %1360 = vmatpush1.bf16.msra.mxu0 %v1351
        %1361 = vmatprep.subr.bf16.mxu0 0
        %1362 = vmatpush1.bf16.msra.mxu0 0
        %1363 = vmatprep.subr.bf16.mxu0 0
        %1364 = vmatpush1.bf16.msra.mxu0 0
        %1365 = vmatprep.subr.bf16.mxu0 0
        %1366 = vmatpush1.bf16.msra.mxu0 0
        %1367 = vmatprep.subr.bf16.mxu0 0
        %1368 = vmatpush1.bf16.msra.mxu0 0
        %1369 = vmatprep.subr.bf16.mxu0 0
        %1370 = vmatpush1.bf16.msra.mxu0 0
        %1371 = vmatprep.subr.bf16.mxu0 0
        %1372 = vmatpush1.bf16.msra.mxu0 0
        %1373 = vmatprep.subr.bf16.mxu0 0
        %1374 = vmatpush1.bf16.msra.mxu0 0
        %1375 = vmatprep.subr.bf16.mxu0 0
        %1376 = vmatpush1.bf16.msra.mxu0 0
        %1377 = vmatprep.subr.bf16.mxu0 0
        %1378 = vmatpush1.bf16.msra.mxu0 0
        %1379 = vmatprep.subr.bf16.mxu0 0
        %1380 = vmatpush1.bf16.msra.mxu0 0
        %1381 = vmatprep.subr.bf16.mxu0 0
        %1382 = vmatpush1.bf16.msra.mxu0 0
        %1383 = vmatprep.subr.bf16.mxu0 0
        %1384 = vmatpush1.bf16.msra.mxu0 0
        %1385 = vmatprep.subr.bf16.mxu0 0
        %1386 = vmatpush1.bf16.msra.mxu0 0
        %1387 = vmatprep.subr.bf16.mxu0 0
        %1388 = vmatpush1.bf16.msra.mxu0 0
        %1389 = vmatprep.mubr.bf16.mxu0 0
        %1390 = vmatmul.mubr.bf16.gmra.mrb[0].mxu0 %v1355
        %v1391 = vpop.f32.mrb[0].mxu0
        %v1392 = vadd.f32 %v1340, %v1391
        %v1393 = vpop.f32.mrb[0].mxu0
        %v1394 = vpop.f32.mrb[0].mxu0
        %v1395 = vpop.f32.mrb[0].mxu0
        %1396 = vdwg.mxu0
        %v1397 = vmul.f32 %v1392, 0.5
        %v1398 = vmul.f32 %v1392, 0.044715
        %v1399 = vmul.f32 %v1398, %v1392
        %v1400 = vmul.f32 %v1399, %v1392
        %v1401 = vadd.f32 %v1392, %v1400
        %v1402 = vmul.f32 %v1401, 0.7978846
        %v1403 = vtanh.pop %v1402
        %v1404 = vadd.f32 %v1403, 1.0
        %v1405 = vmul.f32 %v1397, %v1404
        %v1406 = vpack.c.bf16 %v1405, %v1405
        %v1407 = vld [vmem:[%s14] sm:$0xf]
        %v1408 = vld [vmem:[%s14 + $0x4] sm:$0xf]
        %v1409 = vld [vmem:[%s14 + $0x8] sm:$0xf]
        %v1410 = vld [vmem:[%s14 + $0xc] sm:$0xf]
        %v1411 = vld [vmem:[%s14 + $0x10] sm:$0xf]
        %v1412 = vld [vmem:[%s14 + $0x14] sm:$0xf]
        %v1413 = vld [vmem:[%s14 + $0x18] sm:$0xf]
        %v1414 = vld [vmem:[%s14 + $0x1c] sm:$0xf]
        %v1415 = vld [vmem:[%s15] sm:$0x1]
        %v1417 = vlaneseq
        %v1418 = vshrl.u32 %v1417, 7
        %v1419 = vsub.s32 0, %v1418
        %v1420 = vrot.slane %v1415, %v1419
        %v1430 = vunpack.c.l.b16 %v1407
        %v1431 = vunpack.c.l.b16 %v1408
        %v1432 = vunpack.c.l.b16 %v1409
        %v1433 = vunpack.c.l.b16 %v1410
        %v1434 = vunpack.c.l.b16 %v1411
        %v1435 = vunpack.c.l.b16 %v1412
        %v1436 = vunpack.c.l.b16 %v1413
        %v1437 = vunpack.c.l.b16 %v1414
        %v1438 = vpack.c.b16 %v1431, %v1430
        %v1439 = vpack.c.b16 %v1433, %v1432
        %v1440 = vpack.c.b16 %v1435, %v1434
        %v1441 = vpack.c.b16 %v1437, %v1436
        %vm1446 = vcmask 523264
        %v1448 = vsel %vm1446, %v1406, 0
        %1450 = vmatprep.subr.bf16.mxu0 0
        %1451 = vmatpush1.bf16.msra.mxu0 %v1438
        %1452 = vmatprep.subr.bf16.mxu0 0
        %1453 = vmatpush1.bf16.msra.mxu0 %v1439
        %1454 = vmatprep.subr.bf16.mxu0 0
        %1455 = vmatpush1.bf16.msra.mxu0 %v1440
        %1456 = vmatprep.subr.bf16.mxu0 0
        %1457 = vmatpush1.bf16.msra.mxu0 %v1441
        %1458 = vmatprep.subr.bf16.mxu0 0
        %1459 = vmatpush1.bf16.msra.mxu0 0
        %1460 = vmatprep.subr.bf16.mxu0 0
        %1461 = vmatpush1.bf16.msra.mxu0 0
        %1462 = vmatprep.subr.bf16.mxu0 0
        %1463 = vmatpush1.bf16.msra.mxu0 0
        %1464 = vmatprep.subr.bf16.mxu0 0
        %1465 = vmatpush1.bf16.msra.mxu0 0
        %1466 = vmatprep.subr.bf16.mxu0 0
        %1467 = vmatpush1.bf16.msra.mxu0 0
        %1468 = vmatprep.subr.bf16.mxu0 0
        %1469 = vmatpush1.bf16.msra.mxu0 0
        %1470 = vmatprep.subr.bf16.mxu0 0
        %1471 = vmatpush1.bf16.msra.mxu0 0
        %1472 = vmatprep.subr.bf16.mxu0 0
        %1473 = vmatpush1.bf16.msra.mxu0 0
        %1474 = vmatprep.subr.bf16.mxu0 0
        %1475 = vmatpush1.bf16.msra.mxu0 0
        %1476 = vmatprep.subr.bf16.mxu0 0
        %1477 = vmatpush1.bf16.msra.mxu0 0
        %1478 = vmatprep.subr.bf16.mxu0 0
        %1479 = vmatpush1.bf16.msra.mxu0 0
        %1480 = vmatprep.subr.bf16.mxu0 0
        %1481 = vmatpush1.bf16.msra.mxu0 0
        %1482 = vmatprep.mubr.bf16.mxu0 0
        %1483 = vmatmul.mubr.bf16.gmra.mrb[0].mxu0 %v1448
        %v1484 = vpop.f32.mrb[0].mxu0
        %v1485 = vadd.f32 %v1420, %v1484
        %v1486 = vpop.f32.mrb[0].mxu0
        %v1487 = vpop.f32.mrb[0].mxu0
        %v1488 = vpop.f32.mrb[0].mxu0
        %1489 = vdwg.mxu0
        %v1490 = vadd.f32 %v1329, %v1485
        %v1491 = vsel %vm659, %v1490, 0.0
        %1492 = vadd.xlane.f32.xlu0 %v1491
        %v1493 = vpop.xlane.xlu0 %1492
        %v1494 = vmul.f32 %v1493, %v663
        %v1495 = vsub.f32 %v1490, %v1494
        %v1496 = vmul.f32 %v1495, %v1495
        %v1497 = vsel %vm659, %v1496, 0.0
        %1498 = vadd.xlane.f32.xlu0 %v1497
        %v1499 = vpop.xlane.xlu0 %1498
        %v1500 = vmul.f32 %v1499, %v663
        %v1501 = vadd.f32 %v1500, 1e-12
        %v1502 = vrsqrt.pop %v1501
        %v1503 = vmul.f32 %v1495, %v1502
        %v1504 = vld [vmem:[%s16] sm:$0x1]
        %v1506 = vlaneseq
        %v1507 = vshrl.u32 %v1506, 7
        %v1508 = vsub.s32 0, %v1507
        %v1509 = vrot.slane %v1504, %v1508
        %v1511 = vmul.f32 %v1503, %v1509
        %v1512 = vld [vmem:[%s17] sm:$0x1]
        %v1514 = vlaneseq
        %v1515 = vshrl.u32 %v1514, 7
        %v1516 = vsub.s32 0, %v1515
        %v1517 = vrot.slane %v1512, %v1516
        %v1519 = vadd.f32 %v1511, %v1517
        %v1520 = vpack.c.bf16 %v1519, %v1519
        %v1521 = vld [vmem:[%s18] sm:$0xf]
        %v1522 = vld [vmem:[%s18 + $0x4] sm:$0xf]
        %v1523 = vld [vmem:[%s18 + $0x8] sm:$0xf]
        %v1524 = vld [vmem:[%s18 + $0xc] sm:$0xf]
        %v1525 = vld [vmem:[%s19] sm:$0x1]
        %v1530 = vunpack.c.l.b16 %v1521
        %v1531 = vunpack.c.l.b16 %v1522
        %v1532 = vunpack.c.l.b16 %v1523
        %v1533 = vunpack.c.l.b16 %v1524
        %v1534 = vpack.c.b16 %v1531, %v1530
        %v1535 = vpack.c.b16 %v1533, %v1532
        %v1539 = vsel %vm659, %v1520, 0
        %1541 = vmatprep.subr.bf16.mxu0 0
        %1542 = vmatpush1.bf16.msra.mxu0 %v1534
        %1543 = vmatprep.subr.bf16.mxu0 0
        %1544 = vmatpush1.bf16.msra.mxu0 %v1535
        %1545 = vmatprep.subr.bf16.mxu0 0
        %1546 = vmatpush1.bf16.msra.mxu0 0
        %1547 = vmatprep.subr.bf16.mxu0 0
        %1548 = vmatpush1.bf16.msra.mxu0 0
        %1549 = vmatprep.subr.bf16.mxu0 0
        %1550 = vmatpush1.bf16.msra.mxu0 0
        %1551 = vmatprep.subr.bf16.mxu0 0
        %1552 = vmatpush1.bf16.msra.mxu0 0
        %1553 = vmatprep.subr.bf16.mxu0 0
        %1554 = vmatpush1.bf16.msra.mxu0 0
        %1555 = vmatprep.subr.bf16.mxu0 0
        %1556 = vmatpush1.bf16.msra.mxu0 0
        %1557 = vmatprep.subr.bf16.mxu0 0
        %1558 = vmatpush1.bf16.msra.mxu0 0
        %1559 = vmatprep.subr.bf16.mxu0 0
        %1560 = vmatpush1.bf16.msra.mxu0 0
        %1561 = vmatprep.subr.bf16.mxu0 0
        %1562 = vmatpush1.bf16.msra.mxu0 0
        %1563 = vmatprep.subr.bf16.mxu0 0
        %1564 = vmatpush1.bf16.msra.mxu0 0
        %1565 = vmatprep.subr.bf16.mxu0 0
        %1566 = vmatpush1.bf16.msra.mxu0 0
        %1567 = vmatprep.subr.bf16.mxu0 0
        %1568 = vmatpush1.bf16.msra.mxu0 0
        %1569 = vmatprep.subr.bf16.mxu0 0
        %1570 = vmatpush1.bf16.msra.mxu0 0
        %1571 = vmatprep.subr.bf16.mxu0 0
        %1572 = vmatpush1.bf16.msra.mxu0 0
        %1573 = vmatprep.mubr.bf16.mxu0 0
        %1574 = vmatmul.mubr.bf16.gmra.mrb[0].mxu0 %v1539
        %v1575 = vpop.f32.mrb[0].mxu0
        %v1576 = vadd.f32 %v1525, %v1575
        %v1577 = vpop.f32.mrb[0].mxu0
        %v1578 = vpop.f32.mrb[0].mxu0
        %v1579 = vpop.f32.mrb[0].mxu0
        %1580 = vdwg.mxu0
        %v1581 = vtanh.pop %v1576
        %vm1582 = vcmask 253952
        %1583 = vst.msk [vmem:[%s643] sm:$0x1] %vm1582, %v1581
        %s1584 = sand.u32 %s477, 1
        %s1585 = scalar_lea.sflag [#allocation3], %s1584
        %s1586 = sand.u32 %s477, 1
        %s1587 = scalar_lea.vmem [#allocation2], %s1586
        // Predicated region
        $region101: #{bert_manager_forward.1} parent=99 // pred_check
          %p1588 = pneg %p487
        $region102: #{bert_manager_forward.1} parent=99 // pred_check_branch
          %1590 = sbr.rel (%p1588) target = $region104
        $region103: #{bert_manager_forward.1} parent=99 // pred_region
          %s1592 = ssub.s32 16, 16
          %1593 = vsyncadd %s1585, %s1592
          %s1594 = smul.addr %s34, 16
          %s1595 = scalar_lea.hbm %s20, %s1594
          %s1597 = sshll.u32 %s1587, 4
          %s1598 = int_to_ptr.vmem [resolvable:$true] %s1597
          %1600 = dma.vmem_to_hbm [thread:$0]  %s1598, 16, %s1595, %s1585
        $region104: #{bert_manager_forward.1} parent=99 // pred_fallthru
          _
      $region100: #{bert_manager_forward.1} parent=5 // pred_fallthru
        _
      %p1601 = scmp.le.s32.totalorder 2, %s29
      // Predicated region
      $region105: #{bert_manager_forward.1} parent=5 // pred_check
        %p1602 = pneg %p1601
      $region106: #{bert_manager_forward.1} parent=5 // pred_check_branch
        %1604 = sbr.rel (%p1602) target = $region108
      $region107: #{bert_manager_forward.1} parent=5 // pred_region
        %s1605 = ssub.s32 %s29, 2
        // Predicated region
        $region109: #{bert_manager_forward.1} parent=107 // pred_check
          %p1606 = pneg %p493
        $region110: #{bert_manager_forward.1} parent=107 // pred_check_branch
          %1608 = sbr.rel (%p1606) target = $region112
        $region111: #{bert_manager_forward.1} parent=107 // pred_region
          %s1609 = sand.u32 %s478, 1
          %s1610 = scalar_lea.sflag [#allocation3], %s1609
          %s1611 = sand.u32 %s478, 1
          %s1612 = scalar_lea.vmem [#allocation2], %s1611
          %1613 = dma.done %s1610, 16
        $region112: #{bert_manager_forward.1} parent=107 // pred_fallthru
          _
      $region108: #{bert_manager_forward.1} parent=5 // pred_fallthru
        _
    $region6: #{bert_manager_forward.1} parent=1 // loop_footer
      %s33 = sadd.s32 1, %s29
    $region7: #{bert_manager_forward.1} parent=1 // loop_footer_branch
      %28 = sbr.rel target = $region3
    $region8: #{bert_manager_forward.1} parent=1 // loop_exit
      _
    %1614 = vsyncpa [#allocation3], 1
    %s1615 = scalar_lea.sflag [#allocation3], 1
    %1616 = vsyncpa %s1615, 1

</llo_original>
